<compile_context>
chip_gen: v5e
topology: v5e:2x2
jax: 0.10.0
libtpu: 0.0.40
codegen_flags: <defaults>
</compile_context>

<pallas_src>
import numpy as np
import jax
import jax.numpy as jnp
from jax import lax
from jax.experimental import pallas as pl
from jax.experimental.pallas import tpu as pltpu

# whole-array-in-VMEM spec (all shapes here are tiny; no tiling / grid needed)
_VMEM = pl.BlockSpec(memory_space=pltpu.MemorySpace.VMEM)


# ---------------------------------------------------------------------------
# Fused kernel: bidirectional LSTM encoder + attention(row 0) + decoder + label
# ---------------------------------------------------------------------------
def _fused_kernel(x_ref, wihg_ref, whhg_ref, bg_ref,
                  ws1_ref, bs1_ref, ws2r_ref, bs20_ref,
                  wcx_ref, wch_ref, bc_ref,
                  wihd_ref, whhd_ref, bd_ref, wl_ref, bl_ref,
                  logits_ref, out_scr):
    S, B, E = x_ref.shape
    H = whhd_ref.shape[0]
    H2, H4, H8 = 2 * H, 4 * H, 8 * H

    # ---- hoisted input projection: one (S*B, E) @ (E, 8H) matmul + bias ----
    # columns: [i_f f_f g_f o_f | i_b f_b g_b o_b]
    x_flat = x_ref[...].reshape(S * B, E)
    gx = (jnp.dot(x_flat, wihg_ref[...], preferred_element_type=jnp.float32)
          + bg_ref[...])                              # (S*B, 8H)
    gx = gx.reshape(S, B, H8)

    whh_g = whhg_ref[...]                             # (2H, 8H)  [[Whh_f, 0], [0, Whh_b]]

    # ---- merged fwd/bwd recurrence, fully unrolled (S static & small) ----
    h = jnp.zeros((B, H2), jnp.float32)               # packed [h_f | h_b]
    c_f = jnp.zeros((B, H), jnp.float32)
    c_b = jnp.zeros((B, H), jnp.float32)
    for k in range(S):
        tf = k                                        # forward time step
        tb = S - 1 - k                                # backward time step
        gx_k = jnp.concatenate([gx[tf, :, 0:H4], gx[tb, :, H4:H8]], axis=-1)   # (B, 8H)
        gates = jnp.dot(h, whh_g, preferred_element_type=jnp.float32) + gx_k   # (B, 8H)
        sig = jax.nn.sigmoid(gates)                   # full-width EUP pass
        th = jnp.tanh(gates)                          # full-width EUP pass
        # forward direction (time tf):  c = f*c + i*g
        c_f = sig[:, H:2 * H] * c_f + sig[:, 0:H] * th[:, 2 * H:3 * H]
        # backward direction (time tb)
        c_b = (sig[:, H4 + H:H4 + 2 * H] * c_b
               + sig[:, H4:H4 + H] * th[:, H4 + 2 * H:H4 + 3 * H])
        tc = jnp.tanh(jnp.concatenate([c_f, c_b], axis=-1))                    # (B, 2H)
        h_f = sig[:, 3 * H:4 * H] * tc[:, 0:H]
        h_b = sig[:, H4 + 3 * H:H8] * tc[:, H:H2]
        out_scr[tf, :, 0:H] = h_f                     # encoder output, fwd half
        out_scr[tb, :, H:H2] = h_b                    # encoder output, bwd half
        h = jnp.concatenate([h_f, h_b], axis=-1)

    h_f_fin = h[:, 0:H]                               # h_n[0]  (final forward hidden)
    c_f_fin = c_f                                     # c_n[0]

    # ---- attention: only row 0 of the attention matrix is ever consumed ----
    out_all = out_scr[...]                            # (S, B, 2H), resident in VMEM
    ws1 = ws1_ref[...]
    bs1 = bs1_ref[...]
    ws2r = ws2r_ref[...]                              # (1, 2H)  = W_s2 row 0
    bs20 = bs20_ref[...]                              # (1, 1)
    hm_rows = []
    for b in range(B):                                # B=2: tiny, unrolled
        ob = out_all[:, b, :]                                               # (S, 2H)
        s1 = jnp.tanh(jnp.dot(ob, ws1, preferred_element_type=jnp.float32) + bs1)
        sc = jnp.sum(s1 * ws2r, axis=-1, keepdims=True) + bs20              # (S, 1)
        sc = sc - jnp.max(sc, axis=0, keepdims=True)
        e = jnp.exp(sc)
        a = e * pl.reciprocal(jnp.sum(e, axis=0, keepdims=True), approx=True)
        hm_rows.append(jnp.sum(a * ob, axis=0, keepdims=True))              # (1, 2H)
    hm0 = jnp.concatenate(hm_rows, axis=0)            # (B, 2H) == hidden_matrix[:,0,:]

    # ---- attn_combine + one decoder LSTM step + label ----
    x0 = x_ref[0]                                     # (B, E)
    combined = jnp.tanh(
        jnp.dot(x0, wcx_ref[...], preferred_element_type=jnp.float32)
        + jnp.dot(hm0, wch_ref[...], preferred_element_type=jnp.float32)
        + bc_ref[...])                                # (B, H)
    gates_d = (jnp.dot(combined, wihd_ref[...], preferred_element_type=jnp.float32)
               + jnp.dot(h_f_fin, whhd_ref[...], preferred_element_type=jnp.float32)
               + bd_ref[...])                         # (B, 4H)
    sig_d = jax.nn.sigmoid(gates_d)
    th_d = jnp.tanh(gates_d)
    c_d = sig_d[:, H:2 * H] * c_f_fin + sig_d[:, 0:H] * th_d[:, 2 * H:3 * H]
    h_d = sig_d[:, 3 * H:4 * H] * jnp.tanh(c_d)
    logits_ref[...] = (jnp.dot(h_d, wl_ref[...], preferred_element_type=jnp.float32)
                       + bl_ref[...])


def self_attention_forward(x, f):
    """x: (B, S, E) float32, f: fused params -> logits (B, output_size)."""
    B, S, E = x.shape
    H = f["whh_d"].shape[0]
    out_size = f["wl"].shape[1]
    xs = jnp.transpose(x, (1, 0, 2))                  # time-major, as the module does
    return pl.pallas_call(
        _fused_kernel,
        out_shape=jax.ShapeDtypeStruct((B, out_size), jnp.float32),
        in_specs=[_VMEM] * 16,
        out_specs=_VMEM,
        scratch_shapes=[pltpu.VMEM((S, B, 2 * H), jnp.float32)],
    )(xs, f["wih_g"], f["whh_g"], f["b_g"],
      f["ws1"], f["bs1"], f["ws2_row"], f["bs2_0"],
      f["wc_x"], f["wc_h"], f["bc"],
      f["wih_d"], f["whh_d"], f["b_d"], f["wl"], f["bl"])


# ---------------------------------------------------------------------------
# Parameter fusion (pure jnp, done once outside the kernel)
# ---------------------------------------------------------------------------
def fuse_params(p):
    E = p["wih_f"].shape[0]
    H = p["whh_f"].shape[0]
    whh_g = jnp.zeros((2 * H, 8 * H), jnp.float32)
    whh_g = whh_g.at[:H, :4 * H].set(p["whh_f"])      # block-diagonal recurrent weight
    whh_g = whh_g.at[H:, 4 * H:].set(p["whh_b"])
    return dict(
        wih_g=jnp.concatenate([p["wih_f"], p["wih_b"]], axis=1),   # (E, 8H)
        b_g=jnp.concatenate([p["b_f"], p["b_b"]], axis=1),         # (1, 8H)
        whh_g=whh_g,                                               # (2H, 8H)
        ws1=p["ws1"], bs1=p["bs1"],
        ws2_row=p["ws2"][:, 0:1].T,                                # (1, 2H)
        bs2_0=p["bs2"][:, 0:1],                                    # (1, 1)
        wc_x=p["wc"][:E, :], wc_h=p["wc"][E:, :], bc=p["bc"],
        wih_d=p["wih_d"], whh_d=p["whh_d"], b_d=p["b_d"],
        wl=p["wl"], bl=p["bl"],
    )


# ---------------------------------------------------------------------------
# Pure-JAX reference (unfused, for correctness check)
# ---------------------------------------------------------------------------
def _ref_lstm(x, wih, whh, b, reverse=False):
    H = whh.shape[0]
    B = x.shape[1]

    def step(carry, x_t):
        h, c = carry
        gates = x_t @ wih + h @ whh + b
        i = jax.nn.sigmoid(gates[:, 0:H])
        f = jax.nn.sigmoid(gates[:, H:2 * H])
        g = jnp.tanh(gates[:, 2 * H:3 * H])
        o = jax.nn.sigmoid(gates[:, 3 * H:4 * H])
        c = f * c + i * g
        h = o * jnp.tanh(c)
        return (h, c), h

    init = (jnp.zeros((B, H), jnp.float32), jnp.zeros((B, H), jnp.float32))
    xs = x[::-1] if reverse else x
    (h, c), out = lax.scan(step, init, xs)
    if reverse:
        out = out[::-1]
    return out, h, c


def _ref_forward(x, p):
    xs = jnp.transpose(x, (1, 0, 2))
    out_f, h_f, c_f = _ref_lstm(xs, p["wih_f"], p["whh_f"], p["b_f"])
    out_b, h_b, c_b = _ref_lstm(xs, p["wih_b"], p["whh_b"], p["b_b"], reverse=True)
    output = jnp.concatenate([out_f, out_b], axis=-1)     # (S, B, 2H)
    out_bm = jnp.transpose(output, (1, 0, 2))             # (B, S, 2H)
    s1 = jnp.tanh(out_bm @ p["ws1"] + p["bs1"])
    scores = s1 @ p["ws2"] + p["bs2"]                     # (B, S, M)
    scores = jnp.transpose(scores, (0, 2, 1))             # (B, M, S)
    attn = jax.nn.softmax(scores, axis=-1)
    hm = jnp.einsum("bms,bsh->bmh", attn, out_bm)         # (B, M, 2H)
    E = xs.shape[2]
    cat = jnp.concatenate([xs[0], hm[:, 0, :]], axis=1)   # (B, E + 2H)
    combined = jnp.tanh(cat @ p["wc"] + p["bc"])
    H = p["whh_d"].shape[0]
    gates = combined @ p["wih_d"] + h_f @ p["whh_d"] + p["b_d"]
    i = jax.nn.sigmoid(gates[:, 0:H])
    f = jax.nn.sigmoid(gates[:, H:2 * H])
    g = jnp.tanh(gates[:, 2 * H:3 * H])
    o = jax.nn.sigmoid(gates[:, 3 * H:4 * H])
    c = f * c_f + i * g
    h = o * jnp.tanh(c)
    return h @ p["wl"] + p["bl"]


# ---------------------------------------------------------------------------
# Deterministic parameter init (shapes per the PyTorch __init__, pre-transposed)
# ---------------------------------------------------------------------------
def init_params(key, E, H, M, output_size=2):
    ks = jax.random.split(key, 18)
    s = float(1.0 / np.sqrt(H))

    def u(k, shape, scale=s):
        return jax.random.uniform(k, shape, jnp.float32, -scale, scale)

    return dict(
        # encoder: bidirectional LSTM(E, H); combined biases b_ih + b_hh
        wih_f=u(ks[0], (E, 4 * H)), whh_f=u(ks[1], (H, 4 * H)), b_f=u(ks[2], (1, 4 * H)),
        wih_b=u(ks[3], (E, 4 * H)), whh_b=u(ks[4], (H, 4 * H)), b_b=u(ks[5], (1, 4 * H)),
        # W_s1: Linear(2H, 2H); W_s2: Linear(2H, M)
        ws1=u(ks[6], (2 * H, 2 * H), float(1 / np.sqrt(2 * H))),
        bs1=u(ks[7], (1, 2 * H), float(1 / np.sqrt(2 * H))),
        ws2=u(ks[8], (2 * H, M), float(1 / np.sqrt(2 * H))),
        bs2=u(ks[9], (1, M), float(1 / np.sqrt(2 * H))),
        # attn_combine: Linear(2H + E, H)
        wc=u(ks[10], (E + 2 * H, H), float(1 / np.sqrt(E + 2 * H))),
        bc=u(ks[11], (1, H), float(1 / np.sqrt(E + 2 * H))),
        # decoder: LSTM(H, H)
        wih_d=u(ks[12], (H, 4 * H)), whh_d=u(ks[13], (H, 4 * H)), b_d=u(ks[14], (1, 4 * H)),
        # label: Linear(H, output_size)  (output_size == 2 branch)
        wl=u(ks[15], (H, output_size)), bl=u(ks[16], (1, output_size)),
    )


if __name__ == "__main__":
    B, S, E, H, M = 2, 8, 16, 32, 8     # batch, seq, embedding, hidden, max_seq_length
    output_size = 2

    key = jax.random.PRNGKey(0)
    kx, kp = jax.random.split(key)
    x = jax.random.normal(kx, (B, S, E), jnp.float32)
    params = init_params(kp, E, H, M, output_size)
    fused = fuse_params(params)

    logits = jax.jit(self_attention_forward)(x, fused)
    logits = jax.block_until_ready(logits)

    ref = jax.block_until_ready(_ref_forward(x, params))
    assert logits.shape == (B, output_size)
    # slightly loose tolerance: softmax denominator uses the EUP approx reciprocal
    np.testing.assert_allclose(np.asarray(logits), np.asarray(ref), rtol=2e-3, atol=2e-3)

    print("KERNEL_OK")
</pallas_src>

<mosaic_0001>
module attributes {stable_mosaic.version = 11 : i64} {
  func.func @_fused_kernel(%arg0: memref<8x2x16xf32, #tpu.memory_space<vmem>>, %arg1: memref<16x256xf32, #tpu.memory_space<vmem>>, %arg2: memref<64x256xf32, #tpu.memory_space<vmem>>, %arg3: memref<1x256xf32, #tpu.memory_space<vmem>>, %arg4: memref<64x64xf32, #tpu.memory_space<vmem>>, %arg5: memref<1x64xf32, #tpu.memory_space<vmem>>, %arg6: memref<1x64xf32, #tpu.memory_space<vmem>>, %arg7: memref<1x1xf32, #tpu.memory_space<vmem>>, %arg8: memref<16x32xf32, #tpu.memory_space<vmem>>, %arg9: memref<64x32xf32, #tpu.memory_space<vmem>>, %arg10: memref<1x32xf32, #tpu.memory_space<vmem>>, %arg11: memref<32x128xf32, #tpu.memory_space<vmem>>, %arg12: memref<32x128xf32, #tpu.memory_space<vmem>>, %arg13: memref<1x128xf32, #tpu.memory_space<vmem>>, %arg14: memref<32x2xf32, #tpu.memory_space<vmem>>, %arg15: memref<1x2xf32, #tpu.memory_space<vmem>>, %arg16: memref<2x2xf32, #tpu.memory_space<vmem>>, %arg17: memref<8x2x64xf32, #tpu.memory_space<vmem>>) attributes {dimension_semantics = [], scalar_prefetch = 0 : i64, scratch_operands = 1 : i64, tpu.core_type = #tpu.core_type<tc>} {
    %c0 = arith.constant 0 : index
    %c0_0 = arith.constant 0 : index
    %c0_1 = arith.constant 0 : index
    %0 = vector.load %arg0[%c0, %c0_0, %c0_1] : memref<8x2x16xf32, #tpu.memory_space<vmem>>, vector<8x2x16xf32>
    %1 = vector.shape_cast %0 : vector<8x2x16xf32> to vector<16x16xf32>
    %c0_2 = arith.constant 0 : index
    %c0_3 = arith.constant 0 : index
    %2 = vector.load %arg1[%c0_2, %c0_3] : memref<16x256xf32, #tpu.memory_space<vmem>>, vector<16x256xf32>
    %cst = arith.constant dense<0.000000e+00> : vector<16x256xf32>
    %3 = tpu.matmul %1, %2, %cst {dimension_numbers = #tpu.dot_dimension_numbers<[1], [0], [0], [1], [0, 0, 1, 1], [], []>} : vector<16x16xf32>, vector<16x256xf32>, vector<16x256xf32> -> vector<16x256xf32>
    %c0_4 = arith.constant 0 : index
    %c0_5 = arith.constant 0 : index
    %4 = vector.load %arg3[%c0_4, %c0_5] : memref<1x256xf32, #tpu.memory_space<vmem>>, vector<1x256xf32>
    %5 = vector.broadcast %4 : vector<1x256xf32> to vector<16x256xf32>
    %6 = arith.addf %3, %5 : vector<16x256xf32>
    %7 = vector.shape_cast %6 : vector<16x256xf32> to vector<8x2x256xf32>
    %c0_6 = arith.constant 0 : index
    %c0_7 = arith.constant 0 : index
    %8 = vector.load %arg2[%c0_6, %c0_7] : memref<64x256xf32, #tpu.memory_space<vmem>>, vector<64x256xf32>
    %cst_8 = arith.constant 0.000000e+00 : f32
    %9 = vector.broadcast %cst_8 : f32 to vector<2x64xf32>
    %cst_9 = arith.constant 0.000000e+00 : f32
    %10 = vector.broadcast %cst_9 : f32 to vector<2x32xf32>
    %cst_10 = arith.constant 0.000000e+00 : f32
    %11 = vector.broadcast %cst_10 : f32 to vector<2x32xf32>
    %12 = vector.extract_strided_slice %7 {offsets = [0, 0, 0], sizes = [1, 2, 128], strides = [1, 1, 1]} : vector<8x2x256xf32> to vector<1x2x128xf32>
    %13 = vector.shape_cast %12 : vector<1x2x128xf32> to vector<2x128xf32>
    %14 = vector.extract_strided_slice %7 {offsets = [7, 0, 128], sizes = [1, 2, 128], strides = [1, 1, 1]} : vector<8x2x256xf32> to vector<1x2x128xf32>
    %15 = vector.shape_cast %14 : vector<1x2x128xf32> to vector<2x128xf32>
    %16 = tpu.concatenate %13, %15 in 1 : vector<2x128xf32>, vector<2x128xf32> -> vector<2x256xf32>
    %cst_11 = arith.constant dense<0.000000e+00> : vector<2x256xf32>
    %17 = tpu.matmul %9, %8, %cst_11 {dimension_numbers = #tpu.dot_dimension_numbers<[1], [0], [0], [1], [0, 0, 1, 1], [], []>} : vector<2x64xf32>, vector<64x256xf32>, vector<2x256xf32> -> vector<2x256xf32>
    %18 = arith.addf %17, %16 : vector<2x256xf32>
    %19 = arith.negf %18 : vector<2x256xf32>
    %20 = math.exp %19 : vector<2x256xf32>
    %cst_12 = arith.constant 1.000000e+00 : f32
    %21 = vector.broadcast %cst_12 : f32 to vector<2x256xf32>
    %22 = arith.addf %21, %20 : vector<2x256xf32>
    %23 = arith.divf %21, %22 : vector<2x256xf32>
    %24 = math.tanh %18 : vector<2x256xf32>
    %25 = vector.extract_strided_slice %23 {offsets = [0, 32], sizes = [2, 32], strides = [1, 1]} : vector<2x256xf32> to vector<2x32xf32>
    %26 = arith.mulf %25, %10 : vector<2x32xf32>
    %27 = vector.extract_strided_slice %23 {offsets = [0, 0], sizes = [2, 32], strides = [1, 1]} : vector<2x256xf32> to vector<2x32xf32>
    %28 = vector.extract_strided_slice %24 {offsets = [0, 64], sizes = [2, 32], strides = [1, 1]} : vector<2x256xf32> to vector<2x32xf32>
    %29 = arith.mulf %27, %28 : vector<2x32xf32>
    %30 = arith.addf %26, %29 : vector<2x32xf32>
    %31 = vector.extract_strided_slice %23 {offsets = [0, 160], sizes = [2, 32], strides = [1, 1]} : vector<2x256xf32> to vector<2x32xf32>
    %32 = arith.mulf %31, %11 : vector<2x32xf32>
    %33 = vector.extract_strided_slice %23 {offsets = [0, 128], sizes = [2, 32], strides = [1, 1]} : vector<2x256xf32> to vector<2x32xf32>
    %34 = vector.extract_strided_slice %24 {offsets = [0, 192], sizes = [2, 32], strides = [1, 1]} : vector<2x256xf32> to vector<2x32xf32>
    %35 = arith.mulf %33, %34 : vector<2x32xf32>
    %36 = arith.addf %32, %35 : vector<2x32xf32>
    %37 = tpu.concatenate %30, %36 in 1 : vector<2x32xf32>, vector<2x32xf32> -> vector<2x64xf32>
    %38 = math.tanh %37 : vector<2x64xf32>
    %39 = vector.extract_strided_slice %23 {offsets = [0, 96], sizes = [2, 32], strides = [1, 1]} : vector<2x256xf32> to vector<2x32xf32>
    %40 = vector.extract_strided_slice %38 {offsets = [0, 0], sizes = [2, 32], strides = [1, 1]} : vector<2x64xf32> to vector<2x32xf32>
    %41 = arith.mulf %39, %40 : vector<2x32xf32>
    %42 = vector.extract_strided_slice %23 {offsets = [0, 224], sizes = [2, 32], strides = [1, 1]} : vector<2x256xf32> to vector<2x32xf32>
    %43 = vector.extract_strided_slice %38 {offsets = [0, 32], sizes = [2, 32], strides = [1, 1]} : vector<2x64xf32> to vector<2x32xf32>
    %44 = arith.mulf %42, %43 : vector<2x32xf32>
    %c0_13 = arith.constant 0 : index
    %c0_14 = arith.constant 0 : index
    %c0_15 = arith.constant 0 : index
    %45 = vector.load %arg17[%c0_13, %c0_14, %c0_15] : memref<8x2x64xf32, #tpu.memory_space<vmem>>, vector<1x2x32xf32>
    %46 = vector.shape_cast %45 : vector<1x2x32xf32> to vector<2x32xf32>
    %47 = vector.shape_cast %41 : vector<2x32xf32> to vector<1x2x32xf32>
    tpu.vector_store %arg17[%c0_13, %c0_14, %c0_15], %47 {strides = array<i32>} : memref<8x2x64xf32, #tpu.memory_space<vmem>>, vector<1x2x32xf32>,
    %c7 = arith.constant 7 : index
    %c0_16 = arith.constant 0 : index
    %c32 = arith.constant 32 : index
    %48 = vector.load %arg17[%c7, %c0_16, %c32] : memref<8x2x64xf32, #tpu.memory_space<vmem>>, vector<1x2x32xf32>
    %49 = vector.shape_cast %48 : vector<1x2x32xf32> to vector<2x32xf32>
    %50 = vector.shape_cast %44 : vector<2x32xf32> to vector<1x2x32xf32>
    tpu.vector_store %arg17[%c7, %c0_16, %c32], %50 {strides = array<i32>} : memref<8x2x64xf32, #tpu.memory_space<vmem>>, vector<1x2x32xf32>,
    %51 = tpu.concatenate %41, %44 in 1 : vector<2x32xf32>, vector<2x32xf32> -> vector<2x64xf32>
    %52 = vector.extract_strided_slice %7 {offsets = [1, 0, 0], sizes = [1, 2, 128], strides = [1, 1, 1]} : vector<8x2x256xf32> to vector<1x2x128xf32>
    %53 = vector.shape_cast %52 : vector<1x2x128xf32> to vector<2x128xf32>
    %54 = vector.extract_strided_slice %7 {offsets = [6, 0, 128], sizes = [1, 2, 128], strides = [1, 1, 1]} : vector<8x2x256xf32> to vector<1x2x128xf32>
    %55 = vector.shape_cast %54 : vector<1x2x128xf32> to vector<2x128xf32>
    %56 = tpu.concatenate %53, %55 in 1 : vector<2x128xf32>, vector<2x128xf32> -> vector<2x256xf32>
    %cst_17 = arith.constant dense<0.000000e+00> : vector<2x256xf32>
    %57 = tpu.matmul %51, %8, %cst_17 {dimension_numbers = #tpu.dot_dimension_numbers<[1], [0], [0], [1], [0, 0, 1, 1], [], []>} : vector<2x64xf32>, vector<64x256xf32>, vector<2x256xf32> -> vector<2x256xf32>
    %58 = arith.addf %57, %56 : vector<2x256xf32>
    %59 = arith.negf %58 : vector<2x256xf32>
    %60 = math.exp %59 : vector<2x256xf32>
    %cst_18 = arith.constant 1.000000e+00 : f32
    %61 = vector.broadcast %cst_18 : f32 to vector<2x256xf32>
    %62 = arith.addf %61, %60 : vector<2x256xf32>
    %63 = arith.divf %61, %62 : vector<2x256xf32>
    %64 = math.tanh %58 : vector<2x256xf32>
    %65 = vector.extract_strided_slice %63 {offsets = [0, 32], sizes = [2, 32], strides = [1, 1]} : vector<2x256xf32> to vector<2x32xf32>
    %66 = arith.mulf %65, %30 : vector<2x32xf32>
    %67 = vector.extract_strided_slice %63 {offsets = [0, 0], sizes = [2, 32], strides = [1, 1]} : vector<2x256xf32> to vector<2x32xf32>
    %68 = vector.extract_strided_slice %64 {offsets = [0, 64], sizes = [2, 32], strides = [1, 1]} : vector<2x256xf32> to vector<2x32xf32>
    %69 = arith.mulf %67, %68 : vector<2x32xf32>
    %70 = arith.addf %66, %69 : vector<2x32xf32>
    %71 = vector.extract_strided_slice %63 {offsets = [0, 160], sizes = [2, 32], strides = [1, 1]} : vector<2x256xf32> to vector<2x32xf32>
    %72 = arith.mulf %71, %36 : vector<2x32xf32>
    %73 = vector.extract_strided_slice %63 {offsets = [0, 128], sizes = [2, 32], strides = [1, 1]} : vector<2x256xf32> to vector<2x32xf32>
    %74 = vector.extract_strided_slice %64 {offsets = [0, 192], sizes = [2, 32], strides = [1, 1]} : vector<2x256xf32> to vector<2x32xf32>
    %75 = arith.mulf %73, %74 : vector<2x32xf32>
    %76 = arith.addf %72, %75 : vector<2x32xf32>
    %77 = tpu.concatenate %70, %76 in 1 : vector<2x32xf32>, vector<2x32xf32> -> vector<2x64xf32>
    %78 = math.tanh %77 : vector<2x64xf32>
    %79 = vector.extract_strided_slice %63 {offsets = [0, 96], sizes = [2, 32], strides = [1, 1]} : vector<2x256xf32> to vector<2x32xf32>
    %80 = vector.extract_strided_slice %78 {offsets = [0, 0], sizes = [2, 32], strides = [1, 1]} : vector<2x64xf32> to vector<2x32xf32>
    %81 = arith.mulf %79, %80 : vector<2x32xf32>
    %82 = vector.extract_strided_slice %63 {offsets = [0, 224], sizes = [2, 32], strides = [1, 1]} : vector<2x256xf32> to vector<2x32xf32>
    %83 = vector.extract_strided_slice %78 {offsets = [0, 32], sizes = [2, 32], strides = [1, 1]} : vector<2x64xf32> to vector<2x32xf32>
    %84 = arith.mulf %82, %83 : vector<2x32xf32>
    %c1 = arith.constant 1 : index
    %c0_19 = arith.constant 0 : index
    %c0_20 = arith.constant 0 : index
    %85 = vector.load %arg17[%c1, %c0_19, %c0_20] : memref<8x2x64xf32, #tpu.memory_space<vmem>>, vector<1x2x32xf32>
    %86 = vector.shape_cast %85 : vector<1x2x32xf32> to vector<2x32xf32>
    %87 = vector.shape_cast %81 : vector<2x32xf32> to vector<1x2x32xf32>
    tpu.vector_store %arg17[%c1, %c0_19, %c0_20], %87 {strides = array<i32>} : memref<8x2x64xf32, #tpu.memory_space<vmem>>, vector<1x2x32xf32>,
    %c6 = arith.constant 6 : index
    %c0_21 = arith.constant 0 : index
    %c32_22 = arith.constant 32 : index
    %88 = vector.load %arg17[%c6, %c0_21, %c32_22] : memref<8x2x64xf32, #tpu.memory_space<vmem>>, vector<1x2x32xf32>
    %89 = vector.shape_cast %88 : vector<1x2x32xf32> to vector<2x32xf32>
    %90 = vector.shape_cast %84 : vector<2x32xf32> to vector<1x2x32xf32>
    tpu.vector_store %arg17[%c6, %c0_21, %c32_22], %90 {strides = array<i32>} : memref<8x2x64xf32, #tpu.memory_space<vmem>>, vector<1x2x32xf32>,
    %91 = tpu.concatenate %81, %84 in 1 : vector<2x32xf32>, vector<2x32xf32> -> vector<2x64xf32>
    %92 = vector.extract_strided_slice %7 {offsets = [2, 0, 0], sizes = [1, 2, 128], strides = [1, 1, 1]} : vector<8x2x256xf32> to vector<1x2x128xf32>
    %93 = vector.shape_cast %92 : vector<1x2x128xf32> to vector<2x128xf32>
    %94 = vector.extract_strided_slice %7 {offsets = [5, 0, 128], sizes = [1, 2, 128], strides = [1, 1, 1]} : vector<8x2x256xf32> to vector<1x2x128xf32>
    %95 = vector.shape_cast %94 : vector<1x2x128xf32> to vector<2x128xf32>
    %96 = tpu.concatenate %93, %95 in 1 : vector<2x128xf32>, vector<2x128xf32> -> vector<2x256xf32>
    %cst_23 = arith.constant dense<0.000000e+00> : vector<2x256xf32>
    %97 = tpu.matmul %91, %8, %cst_23 {dimension_numbers = #tpu.dot_dimension_numbers<[1], [0], [0], [1], [0, 0, 1, 1], [], []>} : vector<2x64xf32>, vector<64x256xf32>, vector<2x256xf32> -> vector<2x256xf32>
    %98 = arith.addf %97, %96 : vector<2x256xf32>
    %99 = arith.negf %98 : vector<2x256xf32>
    %100 = math.exp %99 : vector<2x256xf32>
    %cst_24 = arith.constant 1.000000e+00 : f32
    %101 = vector.broadcast %cst_24 : f32 to vector<2x256xf32>
    %102 = arith.addf %101, %100 : vector<2x256xf32>
    %103 = arith.divf %101, %102 : vector<2x256xf32>
    %104 = math.tanh %98 : vector<2x256xf32>
    %105 = vector.extract_strided_slice %103 {offsets = [0, 32], sizes = [2, 32], strides = [1, 1]} : vector<2x256xf32> to vector<2x32xf32>
    %106 = arith.mulf %105, %70 : vector<2x32xf32>
    %107 = vector.extract_strided_slice %103 {offsets = [0, 0], sizes = [2, 32], strides = [1, 1]} : vector<2x256xf32> to vector<2x32xf32>
    %108 = vector.extract_strided_slice %104 {offsets = [0, 64], sizes = [2, 32], strides = [1, 1]} : vector<2x256xf32> to vector<2x32xf32>
    %109 = arith.mulf %107, %108 : vector<2x32xf32>
    %110 = arith.addf %106, %109 : vector<2x32xf32>
    %111 = vector.extract_strided_slice %103 {offsets = [0, 160], sizes = [2, 32], strides = [1, 1]} : vector<2x256xf32> to vector<2x32xf32>
    %112 = arith.mulf %111, %76 : vector<2x32xf32>
    %113 = vector.extract_strided_slice %103 {offsets = [0, 128], sizes = [2, 32], strides = [1, 1]} : vector<2x256xf32> to vector<2x32xf32>
    %114 = vector.extract_strided_slice %104 {offsets = [0, 192], sizes = [2, 32], strides = [1, 1]} : vector<2x256xf32> to vector<2x32xf32>
    %115 = arith.mulf %113, %114 : vector<2x32xf32>
    %116 = arith.addf %112, %115 : vector<2x32xf32>
    %117 = tpu.concatenate %110, %116 in 1 : vector<2x32xf32>, vector<2x32xf32> -> vector<2x64xf32>
    %118 = math.tanh %117 : vector<2x64xf32>
    %119 = vector.extract_strided_slice %103 {offsets = [0, 96], sizes = [2, 32], strides = [1, 1]} : vector<2x256xf32> to vector<2x32xf32>
    %120 = vector.extract_strided_slice %118 {offsets = [0, 0], sizes = [2, 32], strides = [1, 1]} : vector<2x64xf32> to vector<2x32xf32>
    %121 = arith.mulf %119, %120 : vector<2x32xf32>
    %122 = vector.extract_strided_slice %103 {offsets = [0, 224], sizes = [2, 32], strides = [1, 1]} : vector<2x256xf32> to vector<2x32xf32>
    %123 = vector.extract_strided_slice %118 {offsets = [0, 32], sizes = [2, 32], strides = [1, 1]} : vector<2x64xf32> to vector<2x32xf32>
    %124 = arith.mulf %122, %123 : vector<2x32xf32>
    %c2 = arith.constant 2 : index
    %c0_25 = arith.constant 0 : index
    %c0_26 = arith.constant 0 : index
    %125 = vector.load %arg17[%c2, %c0_25, %c0_26] : memref<8x2x64xf32, #tpu.memory_space<vmem>>, vector<1x2x32xf32>
    %126 = vector.shape_cast %125 : vector<1x2x32xf32> to vector<2x32xf32>
    %127 = vector.shape_cast %121 : vector<2x32xf32> to vector<1x2x32xf32>
    tpu.vector_store %arg17[%c2, %c0_25, %c0_26], %127 {strides = array<i32>} : memref<8x2x64xf32, #tpu.memory_space<vmem>>, vector<1x2x32xf32>,
    %c5 = arith.constant 5 : index
    %c0_27 = arith.constant 0 : index
    %c32_28 = arith.constant 32 : index
    %128 = vector.load %arg17[%c5, %c0_27, %c32_28] : memref<8x2x64xf32, #tpu.memory_space<vmem>>, vector<1x2x32xf32>
    %129 = vector.shape_cast %128 : vector<1x2x32xf32> to vector<2x32xf32>
    %130 = vector.shape_cast %124 : vector<2x32xf32> to vector<1x2x32xf32>
    tpu.vector_store %arg17[%c5, %c0_27, %c32_28], %130 {strides = array<i32>} : memref<8x2x64xf32, #tpu.memory_space<vmem>>, vector<1x2x32xf32>,
    %131 = tpu.concatenate %121, %124 in 1 : vector<2x32xf32>, vector<2x32xf32> -> vector<2x64xf32>
    %132 = vector.extract_strided_slice %7 {offsets = [3, 0, 0], sizes = [1, 2, 128], strides = [1, 1, 1]} : vector<8x2x256xf32> to vector<1x2x128xf32>
    %133 = vector.shape_cast %132 : vector<1x2x128xf32> to vector<2x128xf32>
    %134 = vector.extract_strided_slice %7 {offsets = [4, 0, 128], sizes = [1, 2, 128], strides = [1, 1, 1]} : vector<8x2x256xf32> to vector<1x2x128xf32>
    %135 = vector.shape_cast %134 : vector<1x2x128xf32> to vector<2x128xf32>
    %136 = tpu.concatenate %133, %135 in 1 : vector<2x128xf32>, vector<2x128xf32> -> vector<2x256xf32>
    %cst_29 = arith.constant dense<0.000000e+00> : vector<2x256xf32>
    %137 = tpu.matmul %131, %8, %cst_29 {dimension_numbers = #tpu.dot_dimension_numbers<[1], [0], [0], [1], [0, 0, 1, 1], [], []>} : vector<2x64xf32>, vector<64x256xf32>, vector<2x256xf32> -> vector<2x256xf32>
    %138 = arith.addf %137, %136 : vector<2x256xf32>
    %139 = arith.negf %138 : vector<2x256xf32>
    %140 = math.exp %139 : vector<2x256xf32>
    %cst_30 = arith.constant 1.000000e+00 : f32
    %141 = vector.broadcast %cst_30 : f32 to vector<2x256xf32>
    %142 = arith.addf %141, %140 : vector<2x256xf32>
    %143 = arith.divf %141, %142 : vector<2x256xf32>
    %144 = math.tanh %138 : vector<2x256xf32>
    %145 = vector.extract_strided_slice %143 {offsets = [0, 32], sizes = [2, 32], strides = [1, 1]} : vector<2x256xf32> to vector<2x32xf32>
    %146 = arith.mulf %145, %110 : vector<2x32xf32>
    %147 = vector.extract_strided_slice %143 {offsets = [0, 0], sizes = [2, 32], strides = [1, 1]} : vector<2x256xf32> to vector<2x32xf32>
    %148 = vector.extract_strided_slice %144 {offsets = [0, 64], sizes = [2, 32], strides = [1, 1]} : vector<2x256xf32> to vector<2x32xf32>
    %149 = arith.mulf %147, %148 : vector<2x32xf32>
    %150 = arith.addf %146, %149 : vector<2x32xf32>
    %151 = vector.extract_strided_slice %143 {offsets = [0, 160], sizes = [2, 32], strides = [1, 1]} : vector<2x256xf32> to vector<2x32xf32>
    %152 = arith.mulf %151, %116 : vector<2x32xf32>
    %153 = vector.extract_strided_slice %143 {offsets = [0, 128], sizes = [2, 32], strides = [1, 1]} : vector<2x256xf32> to vector<2x32xf32>
    %154 = vector.extract_strided_slice %144 {offsets = [0, 192], sizes = [2, 32], strides = [1, 1]} : vector<2x256xf32> to vector<2x32xf32>
    %155 = arith.mulf %153, %154 : vector<2x32xf32>
    %156 = arith.addf %152, %155 : vector<2x32xf32>
    %157 = tpu.concatenate %150, %156 in 1 : vector<2x32xf32>, vector<2x32xf32> -> vector<2x64xf32>
    %158 = math.tanh %157 : vector<2x64xf32>
    %159 = vector.extract_strided_slice %143 {offsets = [0, 96], sizes = [2, 32], strides = [1, 1]} : vector<2x256xf32> to vector<2x32xf32>
    %160 = vector.extract_strided_slice %158 {offsets = [0, 0], sizes = [2, 32], strides = [1, 1]} : vector<2x64xf32> to vector<2x32xf32>
    %161 = arith.mulf %159, %160 : vector<2x32xf32>
    %162 = vector.extract_strided_slice %143 {offsets = [0, 224], sizes = [2, 32], strides = [1, 1]} : vector<2x256xf32> to vector<2x32xf32>
    %163 = vector.extract_strided_slice %158 {offsets = [0, 32], sizes = [2, 32], strides = [1, 1]} : vector<2x64xf32> to vector<2x32xf32>
    %164 = arith.mulf %162, %163 : vector<2x32xf32>
    %c3 = arith.constant 3 : index
    %c0_31 = arith.constant 0 : index
    %c0_32 = arith.constant 0 : index
    %165 = vector.load %arg17[%c3, %c0_31, %c0_32] : memref<8x2x64xf32, #tpu.memory_space<vmem>>, vector<1x2x32xf32>
    %166 = vector.shape_cast %165 : vector<1x2x32xf32> to vector<2x32xf32>
    %167 = vector.shape_cast %161 : vector<2x32xf32> to vector<1x2x32xf32>
    tpu.vector_store %arg17[%c3, %c0_31, %c0_32], %167 {strides = array<i32>} : memref<8x2x64xf32, #tpu.memory_space<vmem>>, vector<1x2x32xf32>,
    %c4 = arith.constant 4 : index
    %c0_33 = arith.constant 0 : index
    %c32_34 = arith.constant 32 : index
    %168 = vector.load %arg17[%c4, %c0_33, %c32_34] : memref<8x2x64xf32, #tpu.memory_space<vmem>>, vector<1x2x32xf32>
    %169 = vector.shape_cast %168 : vector<1x2x32xf32> to vector<2x32xf32>
    %170 = vector.shape_cast %164 : vector<2x32xf32> to vector<1x2x32xf32>
    tpu.vector_store %arg17[%c4, %c0_33, %c32_34], %170 {strides = array<i32>} : memref<8x2x64xf32, #tpu.memory_space<vmem>>, vector<1x2x32xf32>,
    %171 = tpu.concatenate %161, %164 in 1 : vector<2x32xf32>, vector<2x32xf32> -> vector<2x64xf32>
    %172 = vector.extract_strided_slice %7 {offsets = [4, 0, 0], sizes = [1, 2, 128], strides = [1, 1, 1]} : vector<8x2x256xf32> to vector<1x2x128xf32>
    %173 = vector.shape_cast %172 : vector<1x2x128xf32> to vector<2x128xf32>
    %174 = vector.extract_strided_slice %7 {offsets = [3, 0, 128], sizes = [1, 2, 128], strides = [1, 1, 1]} : vector<8x2x256xf32> to vector<1x2x128xf32>
    %175 = vector.shape_cast %174 : vector<1x2x128xf32> to vector<2x128xf32>
    %176 = tpu.concatenate %173, %175 in 1 : vector<2x128xf32>, vector<2x128xf32> -> vector<2x256xf32>
    %cst_35 = arith.constant dense<0.000000e+00> : vector<2x256xf32>
    %177 = tpu.matmul %171, %8, %cst_35 {dimension_numbers = #tpu.dot_dimension_numbers<[1], [0], [0], [1], [0, 0, 1, 1], [], []>} : vector<2x64xf32>, vector<64x256xf32>, vector<2x256xf32> -> vector<2x256xf32>
    %178 = arith.addf %177, %176 : vector<2x256xf32>
    %179 = arith.negf %178 : vector<2x256xf32>
    %180 = math.exp %179 : vector<2x256xf32>
    %cst_36 = arith.constant 1.000000e+00 : f32
    %181 = vector.broadcast %cst_36 : f32 to vector<2x256xf32>
    %182 = arith.addf %181, %180 : vector<2x256xf32>
    %183 = arith.divf %181, %182 : vector<2x256xf32>
    %184 = math.tanh %178 : vector<2x256xf32>
    %185 = vector.extract_strided_slice %183 {offsets = [0, 32], sizes = [2, 32], strides = [1, 1]} : vector<2x256xf32> to vector<2x32xf32>
    %186 = arith.mulf %185, %150 : vector<2x32xf32>
    %187 = vector.extract_strided_slice %183 {offsets = [0, 0], sizes = [2, 32], strides = [1, 1]} : vector<2x256xf32> to vector<2x32xf32>
    %188 = vector.extract_strided_slice %184 {offsets = [0, 64], sizes = [2, 32], strides = [1, 1]} : vector<2x256xf32> to vector<2x32xf32>
    %189 = arith.mulf %187, %188 : vector<2x32xf32>
    %190 = arith.addf %186, %189 : vector<2x32xf32>
    %191 = vector.extract_strided_slice %183 {offsets = [0, 160], sizes = [2, 32], strides = [1, 1]} : vector<2x256xf32> to vector<2x32xf32>
    %192 = arith.mulf %191, %156 : vector<2x32xf32>
    %193 = vector.extract_strided_slice %183 {offsets = [0, 128], sizes = [2, 32], strides = [1, 1]} : vector<2x256xf32> to vector<2x32xf32>
    %194 = vector.extract_strided_slice %184 {offsets = [0, 192], sizes = [2, 32], strides = [1, 1]} : vector<2x256xf32> to vector<2x32xf32>
    %195 = arith.mulf %193, %194 : vector<2x32xf32>
    %196 = arith.addf %192, %195 : vector<2x32xf32>
    %197 = tpu.concatenate %190, %196 in 1 : vector<2x32xf32>, vector<2x32xf32> -> vector<2x64xf32>
    %198 = math.tanh %197 : vector<2x64xf32>
    %199 = vector.extract_strided_slice %183 {offsets = [0, 96], sizes = [2, 32], strides = [1, 1]} : vector<2x256xf32> to vector<2x32xf32>
    %200 = vector.extract_strided_slice %198 {offsets = [0, 0], sizes = [2, 32], strides = [1, 1]} : vector<2x64xf32> to vector<2x32xf32>
    %201 = arith.mulf %199, %200 : vector<2x32xf32>
    %202 = vector.extract_strided_slice %183 {offsets = [0, 224], sizes = [2, 32], strides = [1, 1]} : vector<2x256xf32> to vector<2x32xf32>
    %203 = vector.extract_strided_slice %198 {offsets = [0, 32], sizes = [2, 32], strides = [1, 1]} : vector<2x64xf32> to vector<2x32xf32>
    %204 = arith.mulf %202, %203 : vector<2x32xf32>
    %c4_37 = arith.constant 4 : index
    %c0_38 = arith.constant 0 : index
    %c0_39 = arith.constant 0 : index
    %205 = vector.load %arg17[%c4_37, %c0_38, %c0_39] : memref<8x2x64xf32, #tpu.memory_space<vmem>>, vector<1x2x32xf32>
    %206 = vector.shape_cast %205 : vector<1x2x32xf32> to vector<2x32xf32>
    %207 = vector.shape_cast %201 : vector<2x32xf32> to vector<1x2x32xf32>
    tpu.vector_store %arg17[%c4_37, %c0_38, %c0_39], %207 {strides = array<i32>} : memref<8x2x64xf32, #tpu.memory_space<vmem>>, vector<1x2x32xf32>,
    %c3_40 = arith.constant 3 : index
    %c0_41 = arith.constant 0 : index
    %c32_42 = arith.constant 32 : index
    %208 = vector.load %arg17[%c3_40, %c0_41, %c32_42] : memref<8x2x64xf32, #tpu.memory_space<vmem>>, vector<1x2x32xf32>
    %209 = vector.shape_cast %208 : vector<1x2x32xf32> to vector<2x32xf32>
    %210 = vector.shape_cast %204 : vector<2x32xf32> to vector<1x2x32xf32>
    tpu.vector_store %arg17[%c3_40, %c0_41, %c32_42], %210 {strides = array<i32>} : memref<8x2x64xf32, #tpu.memory_space<vmem>>, vector<1x2x32xf32>,
    %211 = tpu.concatenate %201, %204 in 1 : vector<2x32xf32>, vector<2x32xf32> -> vector<2x64xf32>
    %212 = vector.extract_strided_slice %7 {offsets = [5, 0, 0], sizes = [1, 2, 128], strides = [1, 1, 1]} : vector<8x2x256xf32> to vector<1x2x128xf32>
    %213 = vector.shape_cast %212 : vector<1x2x128xf32> to vector<2x128xf32>
    %214 = vector.extract_strided_slice %7 {offsets = [2, 0, 128], sizes = [1, 2, 128], strides = [1, 1, 1]} : vector<8x2x256xf32> to vector<1x2x128xf32>
    %215 = vector.shape_cast %214 : vector<1x2x128xf32> to vector<2x128xf32>
    %216 = tpu.concatenate %213, %215 in 1 : vector<2x128xf32>, vector<2x128xf32> -> vector<2x256xf32>
    %cst_43 = arith.constant dense<0.000000e+00> : vector<2x256xf32>
    %217 = tpu.matmul %211, %8, %cst_43 {dimension_numbers = #tpu.dot_dimension_numbers<[1], [0], [0], [1], [0, 0, 1, 1], [], []>} : vector<2x64xf32>, vector<64x256xf32>, vector<2x256xf32> -> vector<2x256xf32>
    %218 = arith.addf %217, %216 : vector<2x256xf32>
    %219 = arith.negf %218 : vector<2x256xf32>
    %220 = math.exp %219 : vector<2x256xf32>
    %cst_44 = arith.constant 1.000000e+00 : f32
    %221 = vector.broadcast %cst_44 : f32 to vector<2x256xf32>
    %222 = arith.addf %221, %220 : vector<2x256xf32>
    %223 = arith.divf %221, %222 : vector<2x256xf32>
    %224 = math.tanh %218 : vector<2x256xf32>
    %225 = vector.extract_strided_slice %223 {offsets = [0, 32], sizes = [2, 32], strides = [1, 1]} : vector<2x256xf32> to vector<2x32xf32>
    %226 = arith.mulf %225, %190 : vector<2x32xf32>
    %227 = vector.extract_strided_slice %223 {offsets = [0, 0], sizes = [2, 32], strides = [1, 1]} : vector<2x256xf32> to vector<2x32xf32>
    %228 = vector.extract_strided_slice %224 {offsets = [0, 64], sizes = [2, 32], strides = [1, 1]} : vector<2x256xf32> to vector<2x32xf32>
    %229 = arith.mulf %227, %228 : vector<2x32xf32>
    %230 = arith.addf %226, %229 : vector<2x32xf32>
    %231 = vector.extract_strided_slice %223 {offsets = [0, 160], sizes = [2, 32], strides = [1, 1]} : vector<2x256xf32> to vector<2x32xf32>
    %232 = arith.mulf %231, %196 : vector<2x32xf32>
    %233 = vector.extract_strided_slice %223 {offsets = [0, 128], sizes = [2, 32], strides = [1, 1]} : vector<2x256xf32> to vector<2x32xf32>
    %234 = vector.extract_strided_slice %224 {offsets = [0, 192], sizes = [2, 32], strides = [1, 1]} : vector<2x256xf32> to vector<2x32xf32>
    %235 = arith.mulf %233, %234 : vector<2x32xf32>
    %236 = arith.addf %232, %235 : vector<2x32xf32>
    %237 = tpu.concatenate %230, %236 in 1 : vector<2x32xf32>, vector<2x32xf32> -> vector<2x64xf32>
    %238 = math.tanh %237 : vector<2x64xf32>
    %239 = vector.extract_strided_slice %223 {offsets = [0, 96], sizes = [2, 32], strides = [1, 1]} : vector<2x256xf32> to vector<2x32xf32>
    %240 = vector.extract_strided_slice %238 {offsets = [0, 0], sizes = [2, 32], strides = [1, 1]} : vector<2x64xf32> to vector<2x32xf32>
    %241 = arith.mulf %239, %240 : vector<2x32xf32>
    %242 = vector.extract_strided_slice %223 {offsets = [0, 224], sizes = [2, 32], strides = [1, 1]} : vector<2x256xf32> to vector<2x32xf32>
    %243 = vector.extract_strided_slice %238 {offsets = [0, 32], sizes = [2, 32], strides = [1, 1]} : vector<2x64xf32> to vector<2x32xf32>
    %244 = arith.mulf %242, %243 : vector<2x32xf32>
    %c5_45 = arith.constant 5 : index
    %c0_46 = arith.constant 0 : index
    %c0_47 = arith.constant 0 : index
    %245 = vector.load %arg17[%c5_45, %c0_46, %c0_47] : memref<8x2x64xf32, #tpu.memory_space<vmem>>, vector<1x2x32xf32>
    %246 = vector.shape_cast %245 : vector<1x2x32xf32> to vector<2x32xf32>
    %247 = vector.shape_cast %241 : vector<2x32xf32> to vector<1x2x32xf32>
    tpu.vector_store %arg17[%c5_45, %c0_46, %c0_47], %247 {strides = array<i32>} : memref<8x2x64xf32, #tpu.memory_space<vmem>>, vector<1x2x32xf32>,
    %c2_48 = arith.constant 2 : index
    %c0_49 = arith.constant 0 : index
    %c32_50 = arith.constant 32 : index
    %248 = vector.load %arg17[%c2_48, %c0_49, %c32_50] : memref<8x2x64xf32, #tpu.memory_space<vmem>>, vector<1x2x32xf32>
    %249 = vector.shape_cast %248 : vector<1x2x32xf32> to vector<2x32xf32>
    %250 = vector.shape_cast %244 : vector<2x32xf32> to vector<1x2x32xf32>
    tpu.vector_store %arg17[%c2_48, %c0_49, %c32_50], %250 {strides = array<i32>} : memref<8x2x64xf32, #tpu.memory_space<vmem>>, vector<1x2x32xf32>,
    %251 = tpu.concatenate %241, %244 in 1 : vector<2x32xf32>, vector<2x32xf32> -> vector<2x64xf32>
    %252 = vector.extract_strided_slice %7 {offsets = [6, 0, 0], sizes = [1, 2, 128], strides = [1, 1, 1]} : vector<8x2x256xf32> to vector<1x2x128xf32>
    %253 = vector.shape_cast %252 : vector<1x2x128xf32> to vector<2x128xf32>
    %254 = vector.extract_strided_slice %7 {offsets = [1, 0, 128], sizes = [1, 2, 128], strides = [1, 1, 1]} : vector<8x2x256xf32> to vector<1x2x128xf32>
    %255 = vector.shape_cast %254 : vector<1x2x128xf32> to vector<2x128xf32>
    %256 = tpu.concatenate %253, %255 in 1 : vector<2x128xf32>, vector<2x128xf32> -> vector<2x256xf32>
    %cst_51 = arith.constant dense<0.000000e+00> : vector<2x256xf32>
    %257 = tpu.matmul %251, %8, %cst_51 {dimension_numbers = #tpu.dot_dimension_numbers<[1], [0], [0], [1], [0, 0, 1, 1], [], []>} : vector<2x64xf32>, vector<64x256xf32>, vector<2x256xf32> -> vector<2x256xf32>
    %258 = arith.addf %257, %256 : vector<2x256xf32>
    %259 = arith.negf %258 : vector<2x256xf32>
    %260 = math.exp %259 : vector<2x256xf32>
    %cst_52 = arith.constant 1.000000e+00 : f32
    %261 = vector.broadcast %cst_52 : f32 to vector<2x256xf32>
    %262 = arith.addf %261, %260 : vector<2x256xf32>
    %263 = arith.divf %261, %262 : vector<2x256xf32>
    %264 = math.tanh %258 : vector<2x256xf32>
    %265 = vector.extract_strided_slice %263 {offsets = [0, 32], sizes = [2, 32], strides = [1, 1]} : vector<2x256xf32> to vector<2x32xf32>
    %266 = arith.mulf %265, %230 : vector<2x32xf32>
    %267 = vector.extract_strided_slice %263 {offsets = [0, 0], sizes = [2, 32], strides = [1, 1]} : vector<2x256xf32> to vector<2x32xf32>
    %268 = vector.extract_strided_slice %264 {offsets = [0, 64], sizes = [2, 32], strides = [1, 1]} : vector<2x256xf32> to vector<2x32xf32>
    %269 = arith.mulf %267, %268 : vector<2x32xf32>
    %270 = arith.addf %266, %269 : vector<2x32xf32>
    %271 = vector.extract_strided_slice %263 {offsets = [0, 160], sizes = [2, 32], strides = [1, 1]} : vector<2x256xf32> to vector<2x32xf32>
    %272 = arith.mulf %271, %236 : vector<2x32xf32>
    %273 = vector.extract_strided_slice %263 {offsets = [0, 128], sizes = [2, 32], strides = [1, 1]} : vector<2x256xf32> to vector<2x32xf32>
    %274 = vector.extract_strided_slice %264 {offsets = [0, 192], sizes = [2, 32], strides = [1, 1]} : vector<2x256xf32> to vector<2x32xf32>
    %275 = arith.mulf %273, %274 : vector<2x32xf32>
    %276 = arith.addf %272, %275 : vector<2x32xf32>
    %277 = tpu.concatenate %270, %276 in 1 : vector<2x32xf32>, vector<2x32xf32> -> vector<2x64xf32>
    %278 = math.tanh %277 : vector<2x64xf32>
    %279 = vector.extract_strided_slice %263 {offsets = [0, 96], sizes = [2, 32], strides = [1, 1]} : vector<2x256xf32> to vector<2x32xf32>
    %280 = vector.extract_strided_slice %278 {offsets = [0, 0], sizes = [2, 32], strides = [1, 1]} : vector<2x64xf32> to vector<2x32xf32>
    %281 = arith.mulf %279, %280 : vector<2x32xf32>
    %282 = vector.extract_strided_slice %263 {offsets = [0, 224], sizes = [2, 32], strides = [1, 1]} : vector<2x256xf32> to vector<2x32xf32>
    %283 = vector.extract_strided_slice %278 {offsets = [0, 32], sizes = [2, 32], strides = [1, 1]} : vector<2x64xf32> to vector<2x32xf32>
    %284 = arith.mulf %282, %283 : vector<2x32xf32>
    %c6_53 = arith.constant 6 : index
    %c0_54 = arith.constant 0 : index
    %c0_55 = arith.constant 0 : index
    %285 = vector.load %arg17[%c6_53, %c0_54, %c0_55] : memref<8x2x64xf32, #tpu.memory_space<vmem>>, vector<1x2x32xf32>
    %286 = vector.shape_cast %285 : vector<1x2x32xf32> to vector<2x32xf32>
    %287 = vector.shape_cast %281 : vector<2x32xf32> to vector<1x2x32xf32>
    tpu.vector_store %arg17[%c6_53, %c0_54, %c0_55], %287 {strides = array<i32>} : memref<8x2x64xf32, #tpu.memory_space<vmem>>, vector<1x2x32xf32>,
    %c1_56 = arith.constant 1 : index
    %c0_57 = arith.constant 0 : index
    %c32_58 = arith.constant 32 : index
    %288 = vector.load %arg17[%c1_56, %c0_57, %c32_58] : memref<8x2x64xf32, #tpu.memory_space<vmem>>, vector<1x2x32xf32>
    %289 = vector.shape_cast %288 : vector<1x2x32xf32> to vector<2x32xf32>
    %290 = vector.shape_cast %284 : vector<2x32xf32> to vector<1x2x32xf32>
    tpu.vector_store %arg17[%c1_56, %c0_57, %c32_58], %290 {strides = array<i32>} : memref<8x2x64xf32, #tpu.memory_space<vmem>>, vector<1x2x32xf32>,
    %291 = tpu.concatenate %281, %284 in 1 : vector<2x32xf32>, vector<2x32xf32> -> vector<2x64xf32>
    %292 = vector.extract_strided_slice %7 {offsets = [7, 0, 0], sizes = [1, 2, 128], strides = [1, 1, 1]} : vector<8x2x256xf32> to vector<1x2x128xf32>
    %293 = vector.shape_cast %292 : vector<1x2x128xf32> to vector<2x128xf32>
    %294 = vector.extract_strided_slice %7 {offsets = [0, 0, 128], sizes = [1, 2, 128], strides = [1, 1, 1]} : vector<8x2x256xf32> to vector<1x2x128xf32>
    %295 = vector.shape_cast %294 : vector<1x2x128xf32> to vector<2x128xf32>
    %296 = tpu.concatenate %293, %295 in 1 : vector<2x128xf32>, vector<2x128xf32> -> vector<2x256xf32>
    %cst_59 = arith.constant dense<0.000000e+00> : vector<2x256xf32>
    %297 = tpu.matmul %291, %8, %cst_59 {dimension_numbers = #tpu.dot_dimension_numbers<[1], [0], [0], [1], [0, 0, 1, 1], [], []>} : vector<2x64xf32>, vector<64x256xf32>, vector<2x256xf32> -> vector<2x256xf32>
    %298 = arith.addf %297, %296 : vector<2x256xf32>
    %299 = arith.negf %298 : vector<2x256xf32>
    %300 = math.exp %299 : vector<2x256xf32>
    %cst_60 = arith.constant 1.000000e+00 : f32
    %301 = vector.broadcast %cst_60 : f32 to vector<2x256xf32>
    %302 = arith.addf %301, %300 : vector<2x256xf32>
    %303 = arith.divf %301, %302 : vector<2x256xf32>
    %304 = math.tanh %298 : vector<2x256xf32>
    %305 = vector.extract_strided_slice %303 {offsets = [0, 32], sizes = [2, 32], strides = [1, 1]} : vector<2x256xf32> to vector<2x32xf32>
    %306 = arith.mulf %305, %270 : vector<2x32xf32>
    %307 = vector.extract_strided_slice %303 {offsets = [0, 0], sizes = [2, 32], strides = [1, 1]} : vector<2x256xf32> to vector<2x32xf32>
    %308 = vector.extract_strided_slice %304 {offsets = [0, 64], sizes = [2, 32], strides = [1, 1]} : vector<2x256xf32> to vector<2x32xf32>
    %309 = arith.mulf %307, %308 : vector<2x32xf32>
    %310 = arith.addf %306, %309 : vector<2x32xf32>
    %311 = vector.extract_strided_slice %303 {offsets = [0, 160], sizes = [2, 32], strides = [1, 1]} : vector<2x256xf32> to vector<2x32xf32>
    %312 = arith.mulf %311, %276 : vector<2x32xf32>
    %313 = vector.extract_strided_slice %303 {offsets = [0, 128], sizes = [2, 32], strides = [1, 1]} : vector<2x256xf32> to vector<2x32xf32>
    %314 = vector.extract_strided_slice %304 {offsets = [0, 192], sizes = [2, 32], strides = [1, 1]} : vector<2x256xf32> to vector<2x32xf32>
    %315 = arith.mulf %313, %314 : vector<2x32xf32>
    %316 = arith.addf %312, %315 : vector<2x32xf32>
    %317 = tpu.concatenate %310, %316 in 1 : vector<2x32xf32>, vector<2x32xf32> -> vector<2x64xf32>
    %318 = math.tanh %317 : vector<2x64xf32>
    %319 = vector.extract_strided_slice %303 {offsets = [0, 96], sizes = [2, 32], strides = [1, 1]} : vector<2x256xf32> to vector<2x32xf32>
    %320 = vector.extract_strided_slice %318 {offsets = [0, 0], sizes = [2, 32], strides = [1, 1]} : vector<2x64xf32> to vector<2x32xf32>
    %321 = arith.mulf %319, %320 : vector<2x32xf32>
    %322 = vector.extract_strided_slice %303 {offsets = [0, 224], sizes = [2, 32], strides = [1, 1]} : vector<2x256xf32> to vector<2x32xf32>
    %323 = vector.extract_strided_slice %318 {offsets = [0, 32], sizes = [2, 32], strides = [1, 1]} : vector<2x64xf32> to vector<2x32xf32>
    %324 = arith.mulf %322, %323 : vector<2x32xf32>
    %c7_61 = arith.constant 7 : index
    %c0_62 = arith.constant 0 : index
    %c0_63 = arith.constant 0 : index
    %325 = vector.load %arg17[%c7_61, %c0_62, %c0_63] : memref<8x2x64xf32, #tpu.memory_space<vmem>>, vector<1x2x32xf32>
    %326 = vector.shape_cast %325 : vector<1x2x32xf32> to vector<2x32xf32>
    %327 = vector.shape_cast %321 : vector<2x32xf32> to vector<1x2x32xf32>
    tpu.vector_store %arg17[%c7_61, %c0_62, %c0_63], %327 {strides = array<i32>} : memref<8x2x64xf32, #tpu.memory_space<vmem>>, vector<1x2x32xf32>,
    %c0_64 = arith.constant 0 : index
    %c0_65 = arith.constant 0 : index
    %c32_66 = arith.constant 32 : index
    %328 = vector.load %arg17[%c0_64, %c0_65, %c32_66] : memref<8x2x64xf32, #tpu.memory_space<vmem>>, vector<1x2x32xf32>
    %329 = vector.shape_cast %328 : vector<1x2x32xf32> to vector<2x32xf32>
    %330 = vector.shape_cast %324 : vector<2x32xf32> to vector<1x2x32xf32>
    tpu.vector_store %arg17[%c0_64, %c0_65, %c32_66], %330 {strides = array<i32>} : memref<8x2x64xf32, #tpu.memory_space<vmem>>, vector<1x2x32xf32>,
    %331 = tpu.concatenate %321, %324 in 1 : vector<2x32xf32>, vector<2x32xf32> -> vector<2x64xf32>
    %332 = vector.extract_strided_slice %331 {offsets = [0, 0], sizes = [2, 32], strides = [1, 1]} : vector<2x64xf32> to vector<2x32xf32>
    %c0_67 = arith.constant 0 : index
    %c0_68 = arith.constant 0 : index
    %c0_69 = arith.constant 0 : index
    %333 = vector.load %arg17[%c0_67, %c0_68, %c0_69] : memref<8x2x64xf32, #tpu.memory_space<vmem>>, vector<8x2x64xf32>
    %c0_70 = arith.constant 0 : index
    %c0_71 = arith.constant 0 : index
    %334 = vector.load %arg4[%c0_70, %c0_71] : memref<64x64xf32, #tpu.memory_space<vmem>>, vector<64x64xf32>
    %c0_72 = arith.constant 0 : index
    %c0_73 = arith.constant 0 : index
    %335 = vector.load %arg5[%c0_72, %c0_73] : memref<1x64xf32, #tpu.memory_space<vmem>>, vector<1x64xf32>
    %c0_74 = arith.constant 0 : index
    %c0_75 = arith.constant 0 : index
    %336 = vector.load %arg6[%c0_74, %c0_75] : memref<1x64xf32, #tpu.memory_space<vmem>>, vector<1x64xf32>
    %c0_76 = arith.constant 0 : index
    %c0_77 = arith.constant 0 : index
    %337 = vector.load %arg7[%c0_76, %c0_77] : memref<1x1xf32, #tpu.memory_space<vmem>>, vector<1x1xf32>
    %338 = vector.extract_strided_slice %333 {offsets = [0, 0, 0], sizes = [8, 1, 64], strides = [1, 1, 1]} : vector<8x2x64xf32> to vector<8x1x64xf32>
    %339 = vector.shape_cast %338 : vector<8x1x64xf32> to vector<8x64xf32>
    %cst_78 = arith.constant dense<0.000000e+00> : vector<8x64xf32>
    %340 = tpu.matmul %339, %334, %cst_78 {dimension_numbers = #tpu.dot_dimension_numbers<[1], [0], [0], [1], [0, 0, 1, 1], [], []>} : vector<8x64xf32>, vector<64x64xf32>, vector<8x64xf32> -> vector<8x64xf32>
    %341 = vector.broadcast %335 : vector<1x64xf32> to vector<8x64xf32>
    %342 = arith.addf %340, %341 : vector<8x64xf32>
    %343 = math.tanh %342 : vector<8x64xf32>
    %344 = vector.broadcast %336 : vector<1x64xf32> to vector<8x64xf32>
    %345 = arith.mulf %343, %344 : vector<8x64xf32>
    %cst_79 = arith.constant dense<0.000000e+00> : vector<8xf32>
    %346 = vector.multi_reduction <add>, %345, %cst_79 [1] : vector<8x64xf32> to vector<8xf32>
    %347 = vector.shape_cast %346 : vector<8xf32> to vector<8x1xf32>
    %348 = vector.broadcast %337 : vector<1x1xf32> to vector<8x1xf32>
    %349 = arith.addf %347, %348 : vector<8x1xf32>
    %cst_80 = arith.constant dense<0xFF800000> : vector<1xf32>
    %350 = vector.multi_reduction <maximumf>, %349, %cst_80 [0] : vector<8x1xf32> to vector<1xf32>
    %351 = vector.shape_cast %350 : vector<1xf32> to vector<1x1xf32>
    %352 = vector.broadcast %351 : vector<1x1xf32> to vector<8x1xf32>
    %353 = arith.subf %349, %352 : vector<8x1xf32>
    %354 = math.exp %353 : vector<8x1xf32>
    %cst_81 = arith.constant dense<0.000000e+00> : vector<1xf32>
    %355 = vector.multi_reduction <add>, %354, %cst_81 [0] : vector<8x1xf32> to vector<1xf32>
    %356 = vector.shape_cast %355 : vector<1xf32> to vector<1x1xf32>
    %357 = tpu.reciprocal %356 {approx = true} : vector<1x1xf32> -> vector<1x1xf32>
    %358 = vector.broadcast %357 : vector<1x1xf32> to vector<8x1xf32>
    %359 = arith.mulf %354, %358 : vector<8x1xf32>
    %360 = vector.broadcast %359 : vector<8x1xf32> to vector<8x64xf32>
    %361 = arith.mulf %360, %339 : vector<8x64xf32>
    %cst_82 = arith.constant dense<0.000000e+00> : vector<64xf32>
    %362 = vector.multi_reduction <add>, %361, %cst_82 [0] : vector<8x64xf32> to vector<64xf32>
    %363 = vector.shape_cast %362 : vector<64xf32> to vector<1x64xf32>
    %364 = vector.extract_strided_slice %333 {offsets = [0, 1, 0], sizes = [8, 1, 64], strides = [1, 1, 1]} : vector<8x2x64xf32> to vector<8x1x64xf32>
    %365 = vector.shape_cast %364 : vector<8x1x64xf32> to vector<8x64xf32>
    %cst_83 = arith.constant dense<0.000000e+00> : vector<8x64xf32>
    %366 = tpu.matmul %365, %334, %cst_83 {dimension_numbers = #tpu.dot_dimension_numbers<[1], [0], [0], [1], [0, 0, 1, 1], [], []>} : vector<8x64xf32>, vector<64x64xf32>, vector<8x64xf32> -> vector<8x64xf32>
    %367 = vector.broadcast %335 : vector<1x64xf32> to vector<8x64xf32>
    %368 = arith.addf %366, %367 : vector<8x64xf32>
    %369 = math.tanh %368 : vector<8x64xf32>
    %370 = vector.broadcast %336 : vector<1x64xf32> to vector<8x64xf32>
    %371 = arith.mulf %369, %370 : vector<8x64xf32>
    %cst_84 = arith.constant dense<0.000000e+00> : vector<8xf32>
    %372 = vector.multi_reduction <add>, %371, %cst_84 [1] : vector<8x64xf32> to vector<8xf32>
    %373 = vector.shape_cast %372 : vector<8xf32> to vector<8x1xf32>
    %374 = vector.broadcast %337 : vector<1x1xf32> to vector<8x1xf32>
    %375 = arith.addf %373, %374 : vector<8x1xf32>
    %cst_85 = arith.constant dense<0xFF800000> : vector<1xf32>
    %376 = vector.multi_reduction <maximumf>, %375, %cst_85 [0] : vector<8x1xf32> to vector<1xf32>
    %377 = vector.shape_cast %376 : vector<1xf32> to vector<1x1xf32>
    %378 = vector.broadcast %377 : vector<1x1xf32> to vector<8x1xf32>
    %379 = arith.subf %375, %378 : vector<8x1xf32>
    %380 = math.exp %379 : vector<8x1xf32>
    %cst_86 = arith.constant dense<0.000000e+00> : vector<1xf32>
    %381 = vector.multi_reduction <add>, %380, %cst_86 [0] : vector<8x1xf32> to vector<1xf32>
    %382 = vector.shape_cast %381 : vector<1xf32> to vector<1x1xf32>
    %383 = tpu.reciprocal %382 {approx = true} : vector<1x1xf32> -> vector<1x1xf32>
    %384 = vector.broadcast %383 : vector<1x1xf32> to vector<8x1xf32>
    %385 = arith.mulf %380, %384 : vector<8x1xf32>
    %386 = vector.broadcast %385 : vector<8x1xf32> to vector<8x64xf32>
    %387 = arith.mulf %386, %365 : vector<8x64xf32>
    %cst_87 = arith.constant dense<0.000000e+00> : vector<64xf32>
    %388 = vector.multi_reduction <add>, %387, %cst_87 [0] : vector<8x64xf32> to vector<64xf32>
    %389 = vector.shape_cast %388 : vector<64xf32> to vector<1x64xf32>
    %390 = tpu.concatenate %363, %389 in 0 : vector<1x64xf32>, vector<1x64xf32> -> vector<2x64xf32>
    %c0_88 = arith.constant 0 : index
    %c0_89 = arith.constant 0 : index
    %c0_90 = arith.constant 0 : index
    %391 = vector.load %arg0[%c0_88, %c0_89, %c0_90] : memref<8x2x16xf32, #tpu.memory_space<vmem>>, vector<1x2x16xf32>
    %392 = vector.shape_cast %391 : vector<1x2x16xf32> to vector<2x16xf32>
    %c0_91 = arith.constant 0 : index
    %c0_92 = arith.constant 0 : index
    %393 = vector.load %arg8[%c0_91, %c0_92] : memref<16x32xf32, #tpu.memory_space<vmem>>, vector<16x32xf32>
    %cst_93 = arith.constant dense<0.000000e+00> : vector<2x32xf32>
    %394 = tpu.matmul %392, %393, %cst_93 {dimension_numbers = #tpu.dot_dimension_numbers<[1], [0], [0], [1], [0, 0, 1, 1], [], []>} : vector<2x16xf32>, vector<16x32xf32>, vector<2x32xf32> -> vector<2x32xf32>
    %c0_94 = arith.constant 0 : index
    %c0_95 = arith.constant 0 : index
    %395 = vector.load %arg9[%c0_94, %c0_95] : memref<64x32xf32, #tpu.memory_space<vmem>>, vector<64x32xf32>
    %cst_96 = arith.constant dense<0.000000e+00> : vector<2x32xf32>
    %396 = tpu.matmul %390, %395, %cst_96 {dimension_numbers = #tpu.dot_dimension_numbers<[1], [0], [0], [1], [0, 0, 1, 1], [], []>} : vector<2x64xf32>, vector<64x32xf32>, vector<2x32xf32> -> vector<2x32xf32>
    %397 = arith.addf %394, %396 : vector<2x32xf32>
    %c0_97 = arith.constant 0 : index
    %c0_98 = arith.constant 0 : index
    %398 = vector.load %arg10[%c0_97, %c0_98] : memref<1x32xf32, #tpu.memory_space<vmem>>, vector<1x32xf32>
    %399 = vector.broadcast %398 : vector<1x32xf32> to vector<2x32xf32>
    %400 = arith.addf %397, %399 : vector<2x32xf32>
    %401 = math.tanh %400 : vector<2x32xf32>
    %c0_99 = arith.constant 0 : index
    %c0_100 = arith.constant 0 : index
    %402 = vector.load %arg11[%c0_99, %c0_100] : memref<32x128xf32, #tpu.memory_space<vmem>>, vector<32x128xf32>
    %cst_101 = arith.constant dense<0.000000e+00> : vector<2x128xf32>
    %403 = tpu.matmul %401, %402, %cst_101 {dimension_numbers = #tpu.dot_dimension_numbers<[1], [0], [0], [1], [0, 0, 1, 1], [], []>} : vector<2x32xf32>, vector<32x128xf32>, vector<2x128xf32> -> vector<2x128xf32>
    %c0_102 = arith.constant 0 : index
    %c0_103 = arith.constant 0 : index
    %404 = vector.load %arg12[%c0_102, %c0_103] : memref<32x128xf32, #tpu.memory_space<vmem>>, vector<32x128xf32>
    %cst_104 = arith.constant dense<0.000000e+00> : vector<2x128xf32>
    %405 = tpu.matmul %332, %404, %cst_104 {dimension_numbers = #tpu.dot_dimension_numbers<[1], [0], [0], [1], [0, 0, 1, 1], [], []>} : vector<2x32xf32>, vector<32x128xf32>, vector<2x128xf32> -> vector<2x128xf32>
    %406 = arith.addf %403, %405 : vector<2x128xf32>
    %c0_105 = arith.constant 0 : index
    %c0_106 = arith.constant 0 : index
    %407 = vector.load %arg13[%c0_105, %c0_106] : memref<1x128xf32, #tpu.memory_space<vmem>>, vector<1x128xf32>
    %408 = vector.broadcast %407 : vector<1x128xf32> to vector<2x128xf32>
    %409 = arith.addf %406, %408 : vector<2x128xf32>
    %410 = arith.negf %409 : vector<2x128xf32>
    %411 = math.exp %410 : vector<2x128xf32>
    %cst_107 = arith.constant 1.000000e+00 : f32
    %412 = vector.broadcast %cst_107 : f32 to vector<2x128xf32>
    %413 = arith.addf %412, %411 : vector<2x128xf32>
    %414 = arith.divf %412, %413 : vector<2x128xf32>
    %415 = math.tanh %409 : vector<2x128xf32>
    %416 = vector.extract_strided_slice %414 {offsets = [0, 32], sizes = [2, 32], strides = [1, 1]} : vector<2x128xf32> to vector<2x32xf32>
    %417 = arith.mulf %416, %310 : vector<2x32xf32>
    %418 = vector.extract_strided_slice %414 {offsets = [0, 0], sizes = [2, 32], strides = [1, 1]} : vector<2x128xf32> to vector<2x32xf32>
    %419 = vector.extract_strided_slice %415 {offsets = [0, 64], sizes = [2, 32], strides = [1, 1]} : vector<2x128xf32> to vector<2x32xf32>
    %420 = arith.mulf %418, %419 : vector<2x32xf32>
    %421 = arith.addf %417, %420 : vector<2x32xf32>
    %422 = vector.extract_strided_slice %414 {offsets = [0, 96], sizes = [2, 32], strides = [1, 1]} : vector<2x128xf32> to vector<2x32xf32>
    %423 = math.tanh %421 : vector<2x32xf32>
    %424 = arith.mulf %422, %423 : vector<2x32xf32>
    %c0_108 = arith.constant 0 : index
    %c0_109 = arith.constant 0 : index
    %425 = vector.load %arg14[%c0_108, %c0_109] : memref<32x2xf32, #tpu.memory_space<vmem>>, vector<32x2xf32>
    %cst_110 = arith.constant dense<0.000000e+00> : vector<2x2xf32>
    %426 = tpu.matmul %424, %425, %cst_110 {dimension_numbers = #tpu.dot_dimension_numbers<[1], [0], [0], [1], [0, 0, 1, 1], [], []>} : vector<2x32xf32>, vector<32x2xf32>, vector<2x2xf32> -> vector<2x2xf32>
    %c0_111 = arith.constant 0 : index
    %c0_112 = arith.constant 0 : index
    %427 = vector.load %arg15[%c0_111, %c0_112] : memref<1x2xf32, #tpu.memory_space<vmem>>, vector<1x2xf32>
    %428 = vector.broadcast %427 : vector<1x2xf32> to vector<2x2xf32>
    %429 = arith.addf %426, %428 : vector<2x2xf32>
    %c0_113 = arith.constant 0 : index
    %c0_114 = arith.constant 0 : index
    %430 = vector.load %arg16[%c0_113, %c0_114] : memref<2x2xf32, #tpu.memory_space<vmem>>, vector<2x2xf32>
    tpu.vector_store %arg16[%c0_113, %c0_114], %429 {strides = array<i32>} : memref<2x2xf32, #tpu.memory_space<vmem>>, vector<2x2xf32>,
    return
  }
}

</mosaic_0001>

<llo_original>
// kernel: self_attention_forward.1
$region0: #{self_attention_forward.1}
  #allocation0 [shape = 'u32[]', space=smem, size = 0x4, offset = 0x4, fixed_abs, tag = 'smem constant byte address 0x4 - core index']
  #allocation1 [shape = 'u32[72,128]{1,0:T(1,128)}', space=vmem, size = 0x9000, scoped, tag = 'internal scratch']
  #allocation2 [shape = 'f32[8,2,64]{2,1,0:T(2,128)}', space=vmem, size = 0x2000, scoped, tag = 'scratch operand']
  #allocation3 [shape = 'f32[1,1]{1,0:T(1,128)S(1)}', space=vmem, size = 0x200, scoped, tag = 'scoped memory for self_attention_forward.1']
  %s0 = inlined_call_operand.vmem [shape: f32[8,2,16], index: 0, kind: input, shape index: {}]
  %s1 = inlined_call_operand.hbm [shape: f32[16,256], index: 1, kind: input, shape index: {}]
  %s2 = inlined_call_operand.vmem [shape: f32[64,256], index: 2, kind: input, shape index: {}]
  %s3 = inlined_call_operand.vmem [shape: f32[1,256], index: 3, kind: input, shape index: {}]
  %s4 = inlined_call_operand.hbm [shape: f32[64,64], index: 4, kind: input, shape index: {}]
  %s5 = inlined_call_operand.vmem [shape: f32[1,64], index: 5, kind: input, shape index: {}]
  %s6 = inlined_call_operand.vmem [shape: f32[1,64], index: 6, kind: input, shape index: {}]
  %s7 = inlined_call_operand.<no memory space> [shape: f32[1,1], index: 7, kind: input, shape index: {}]
  %s8 = inlined_call_operand.hbm [shape: f32[16,32], index: 8, kind: input, shape index: {}]
  %s9 = inlined_call_operand.vmem [shape: f32[64,32], index: 9, kind: input, shape index: {}]
  %s10 = inlined_call_operand.hbm [shape: f32[1,32], index: 10, kind: input, shape index: {}]
  %s11 = inlined_call_operand.hbm [shape: f32[32,128], index: 11, kind: input, shape index: {}]
  %s12 = inlined_call_operand.hbm [shape: f32[32,128], index: 12, kind: input, shape index: {}]
  %s13 = inlined_call_operand.hbm [shape: f32[1,128], index: 13, kind: input, shape index: {}]
  %s14 = inlined_call_operand.vmem [shape: f32[32,2], index: 14, kind: input, shape index: {}]
  %s15 = inlined_call_operand.vmem [shape: f32[1,2], index: 15, kind: input, shape index: {}]
  %s16 = inlined_call_operand.hbm [shape: f32[2,2], index: 16, kind: output, shape index: {}]
  %s17 = sld [smem:[#allocation0]]
  $region102: #{self_attention_forward.1} parent=0
    _
  %s19 = ssub.s32 1, %s17
  %s20 = scalar_select 0, %s19, %s17
  %v21 = vstv %s7
  %22 = vst [vmem:[#allocation3] sm:$0x1] %v21
  $region1: #{self_attention_forward.1} parent=0
    #allocation4 [shape = 'u8[16384]{0}', space=vmem, size = 0x4000, scoped, tag = 'input window, operand 1, single buffered']
    #allocation5 [shape = 's32[1]{0}', space=sflag, size = 0x4, scoped, tag = 'scoped memory for self_attention_forward.1']
    #allocation6 [shape = 's32[1]{0}', space=sflag, size = 0x4, scoped, tag = 'scoped memory for self_attention_forward.1']
    #allocation7 [shape = 'u8[32768]{0}', space=vmem, size = 0x8000, scoped, tag = 'input window, operand 4, single buffered']
    #allocation8 [shape = 's32[1]{0}', space=sflag, size = 0x4, scoped, tag = 'scoped memory for self_attention_forward.1']
    #allocation9 [shape = 'u8[8192]{0}', space=vmem, size = 0x2000, scoped, tag = 'input window, operand 8, single buffered']
    #allocation10 [shape = 'u8[512]{0}', space=vmem, size = 0x400, scoped, tag = 'input window, operand 10, single buffered']
    #allocation11 [shape = 's32[1]{0}', space=sflag, size = 0x4, scoped, tag = 'scoped memory for self_attention_forward.1']
    #allocation12 [shape = 'u8[16384]{0}', space=vmem, size = 0x4000, scoped, tag = 'input window, operand 11, single buffered']
    #allocation13 [shape = 'u8[16384]{0}', space=vmem, size = 0x4000, scoped, tag = 'input window, operand 12, single buffered']
    #allocation14 [shape = 's32[1]{0}', space=sflag, size = 0x4, scoped, tag = 'scoped memory for self_attention_forward.1']
    #allocation15 [shape = 'u8[512]{0}', space=vmem, size = 0x400, scoped, tag = 'input window, operand 13, single buffered']
    #allocation16 [shape = 'u8[1024]{0}', space=vmem, size = 0x400, scoped, tag = 'output window, operand 0, single buffered']
    %23 = vsyncpa [#allocation5], 0
    %24 = vsyncpa [#allocation8], 0
    %25 = vsyncpa [#allocation11], 0
    %26 = vsyncpa [#allocation14], 0
    %27 = vsyncpa [#allocation6], 0
    // Predicated region
    $region2: #{self_attention_forward.1} parent=1 // pred_check
      _
    $region3: #{self_attention_forward.1} parent=1 // pred_check_branch
      %29 = sbr.rel (0) target = $region5
    $region4: #{self_attention_forward.1} parent=1 // pred_region
      _
    $region5: #{self_attention_forward.1} parent=1 // pred_fallthru
      _
    // Predicated region
    $region6: #{self_attention_forward.1} parent=1 // pred_check
      _
    $region7: #{self_attention_forward.1} parent=1 // pred_check_branch
      %31 = sbr.rel (0) target = $region9
    $region8: #{self_attention_forward.1} parent=1 // pred_region
      %33 = vsyncadd [#allocation5], 0
      %s34 = sshll.u32 %s1, 4
      %s35 = int_to_ptr.hbm [resolvable:$true] %s34
      %s36 = sshll.u32 [#allocation4], 4
      %s37 = int_to_ptr.vmem [resolvable:$true] %s36
      %42 = dma.hbm_to_vmem [thread:$0]  %s35, 512, %s37, [#allocation5], 256, 256, 16
    $region9: #{self_attention_forward.1} parent=1 // pred_fallthru
      _
    // Predicated region
    $region10: #{self_attention_forward.1} parent=1 // pred_check
      _
    $region11: #{self_attention_forward.1} parent=1 // pred_check_branch
      %44 = sbr.rel (0) target = $region13
    $region12: #{self_attention_forward.1} parent=1 // pred_region
      _
    $region13: #{self_attention_forward.1} parent=1 // pred_fallthru
      _
    // Predicated region
    $region14: #{self_attention_forward.1} parent=1 // pred_check
      _
    $region15: #{self_attention_forward.1} parent=1 // pred_check_branch
      %46 = sbr.rel (0) target = $region17
    $region16: #{self_attention_forward.1} parent=1 // pred_region
      _
    $region17: #{self_attention_forward.1} parent=1 // pred_fallthru
      _
    // Predicated region
    $region18: #{self_attention_forward.1} parent=1 // pred_check
      _
    $region19: #{self_attention_forward.1} parent=1 // pred_check_branch
      %48 = sbr.rel (0) target = $region21
    $region20: #{self_attention_forward.1} parent=1 // pred_region
      %50 = vsyncadd [#allocation8], 0
      %s51 = sshll.u32 %s4, 4
      %s52 = int_to_ptr.hbm [resolvable:$true] %s51
      %s53 = sshll.u32 [#allocation7], 4
      %s54 = int_to_ptr.vmem [resolvable:$true] %s53
      %59 = dma.hbm_to_vmem [thread:$0]  %s52, 1024, %s54, [#allocation8], 128, 128, 8
    $region21: #{self_attention_forward.1} parent=1 // pred_fallthru
      _
    // Predicated region
    $region22: #{self_attention_forward.1} parent=1 // pred_check
      _
    $region23: #{self_attention_forward.1} parent=1 // pred_check_branch
      %61 = sbr.rel (0) target = $region25
    $region24: #{self_attention_forward.1} parent=1 // pred_region
      _
    $region25: #{self_attention_forward.1} parent=1 // pred_fallthru
      _
    // Predicated region
    $region26: #{self_attention_forward.1} parent=1 // pred_check
      _
    $region27: #{self_attention_forward.1} parent=1 // pred_check_branch
      %63 = sbr.rel (0) target = $region29
    $region28: #{self_attention_forward.1} parent=1 // pred_region
      _
    $region29: #{self_attention_forward.1} parent=1 // pred_fallthru
      _
    // Predicated region
    $region30: #{self_attention_forward.1} parent=1 // pred_check
      _
    $region31: #{self_attention_forward.1} parent=1 // pred_check_branch
      %65 = sbr.rel (0) target = $region33
    $region32: #{self_attention_forward.1} parent=1 // pred_region
      _
    $region33: #{self_attention_forward.1} parent=1 // pred_fallthru
      _
    // Predicated region
    $region34: #{self_attention_forward.1} parent=1 // pred_check
      _
    $region35: #{self_attention_forward.1} parent=1 // pred_check_branch
      %67 = sbr.rel (0) target = $region37
    $region36: #{self_attention_forward.1} parent=1 // pred_region
      %69 = vsyncadd [#allocation8], 0
      %s70 = sshll.u32 %s8, 4
      %s71 = int_to_ptr.hbm [resolvable:$true] %s70
      %s72 = sshll.u32 [#allocation9], 4
      %s73 = int_to_ptr.vmem [resolvable:$true] %s72
      %78 = dma.hbm_to_vmem [thread:$0]  %s71, 256, %s73, [#allocation8], 128, 128, 8
    $region37: #{self_attention_forward.1} parent=1 // pred_fallthru
      _
    // Predicated region
    $region38: #{self_attention_forward.1} parent=1 // pred_check
      _
    $region39: #{self_attention_forward.1} parent=1 // pred_check_branch
      %80 = sbr.rel (0) target = $region41
    $region40: #{self_attention_forward.1} parent=1 // pred_region
      _
    $region41: #{self_attention_forward.1} parent=1 // pred_fallthru
      _
    // Predicated region
    $region42: #{self_attention_forward.1} parent=1 // pred_check
      _
    $region43: #{self_attention_forward.1} parent=1 // pred_check_branch
      %82 = sbr.rel (0) target = $region45
    $region44: #{self_attention_forward.1} parent=1 // pred_region
      %84 = vsyncadd [#allocation11], 0
      %s86 = sshll.u32 %s10, 4
      %s87 = int_to_ptr.hbm [resolvable:$true] %s86
      %s88 = sshll.u32 [#allocation10], 4
      %s89 = int_to_ptr.vmem [resolvable:$true] %s88
      %91 = dma.hbm_to_vmem [thread:$0]  %s87, 16, %s89, [#allocation11]
    $region45: #{self_attention_forward.1} parent=1 // pred_fallthru
      _
    // Predicated region
    $region46: #{self_attention_forward.1} parent=1 // pred_check
      _
    $region47: #{self_attention_forward.1} parent=1 // pred_check_branch
      %93 = sbr.rel (0) target = $region49
    $region48: #{self_attention_forward.1} parent=1 // pred_region
      %95 = vsyncadd [#allocation11], 0
      %s96 = sshll.u32 %s11, 4
      %s97 = int_to_ptr.hbm [resolvable:$true] %s96
      %s98 = sshll.u32 [#allocation12], 4
      %s99 = int_to_ptr.vmem [resolvable:$true] %s98
      %104 = dma.hbm_to_vmem [thread:$0]  %s97, 512, %s99, [#allocation11], 128, 128, 8
    $region49: #{self_attention_forward.1} parent=1 // pred_fallthru
      _
    // Predicated region
    $region50: #{self_attention_forward.1} parent=1 // pred_check
      _
    $region51: #{self_attention_forward.1} parent=1 // pred_check_branch
      %106 = sbr.rel (0) target = $region53
    $region52: #{self_attention_forward.1} parent=1 // pred_region
      %108 = vsyncadd [#allocation14], 0
      %s109 = sshll.u32 %s12, 4
      %s110 = int_to_ptr.hbm [resolvable:$true] %s109
      %s111 = sshll.u32 [#allocation13], 4
      %s112 = int_to_ptr.vmem [resolvable:$true] %s111
      %117 = dma.hbm_to_vmem [thread:$0]  %s110, 512, %s112, [#allocation14], 128, 128, 8
    $region53: #{self_attention_forward.1} parent=1 // pred_fallthru
      _
    // Predicated region
    $region54: #{self_attention_forward.1} parent=1 // pred_check
      _
    $region55: #{self_attention_forward.1} parent=1 // pred_check_branch
      %119 = sbr.rel (0) target = $region57
    $region56: #{self_attention_forward.1} parent=1 // pred_region
      %121 = vsyncadd [#allocation14], 0
      %s123 = sshll.u32 %s13, 4
      %s124 = int_to_ptr.hbm [resolvable:$true] %s123
      %s125 = sshll.u32 [#allocation15], 4
      %s126 = int_to_ptr.vmem [resolvable:$true] %s125
      %128 = dma.hbm_to_vmem [thread:$0]  %s124, 16, %s126, [#allocation14]
    $region57: #{self_attention_forward.1} parent=1 // pred_fallthru
      _
    // Predicated region
    $region58: #{self_attention_forward.1} parent=1 // pred_check
      _
    $region59: #{self_attention_forward.1} parent=1 // pred_check_branch
      %130 = sbr.rel (0) target = $region61
    $region60: #{self_attention_forward.1} parent=1 // pred_region
      _
    $region61: #{self_attention_forward.1} parent=1 // pred_fallthru
      _
    // Predicated region
    $region62: #{self_attention_forward.1} parent=1 // pred_check
      _
    $region63: #{self_attention_forward.1} parent=1 // pred_check_branch
      %132 = sbr.rel (0) target = $region65
    $region64: #{self_attention_forward.1} parent=1 // pred_region
      _
    $region65: #{self_attention_forward.1} parent=1 // pred_fallthru
      _
    // Predicated region
    $region66: #{self_attention_forward.1} parent=1 // pred_check
      _
    $region67: #{self_attention_forward.1} parent=1 // pred_check_branch
      %134 = sbr.rel (0) target = $region69
    $region68: #{self_attention_forward.1} parent=1 // pred_region
      %136 = dma.done [#allocation5], 512
    $region69: #{self_attention_forward.1} parent=1 // pred_fallthru
      _
    // Predicated region
    $region70: #{self_attention_forward.1} parent=1 // pred_check
      _
    $region71: #{self_attention_forward.1} parent=1 // pred_check_branch
      %138 = sbr.rel (0) target = $region73
    $region72: #{self_attention_forward.1} parent=1 // pred_region
      %140 = dma.done [#allocation8], 1024
    $region73: #{self_attention_forward.1} parent=1 // pred_fallthru
      _
    // Predicated region
    $region74: #{self_attention_forward.1} parent=1 // pred_check
      _
    $region75: #{self_attention_forward.1} parent=1 // pred_check_branch
      %142 = sbr.rel (0) target = $region77
    $region76: #{self_attention_forward.1} parent=1 // pred_region
      %144 = dma.done [#allocation8], 256
    $region77: #{self_attention_forward.1} parent=1 // pred_fallthru
      _
    // Predicated region
    $region78: #{self_attention_forward.1} parent=1 // pred_check
      _
    $region79: #{self_attention_forward.1} parent=1 // pred_check_branch
      %146 = sbr.rel (0) target = $region81
    $region80: #{self_attention_forward.1} parent=1 // pred_region
      %148 = dma.done [#allocation11], 16
    $region81: #{self_attention_forward.1} parent=1 // pred_fallthru
      _
    // Predicated region
    $region82: #{self_attention_forward.1} parent=1 // pred_check
      _
    $region83: #{self_attention_forward.1} parent=1 // pred_check_branch
      %150 = sbr.rel (0) target = $region85
    $region84: #{self_attention_forward.1} parent=1 // pred_region
      %152 = dma.done [#allocation11], 512
    $region85: #{self_attention_forward.1} parent=1 // pred_fallthru
      _
    // Predicated region
    $region86: #{self_attention_forward.1} parent=1 // pred_check
      _
    $region87: #{self_attention_forward.1} parent=1 // pred_check_branch
      %154 = sbr.rel (0) target = $region89
    $region88: #{self_attention_forward.1} parent=1 // pred_region
      %156 = dma.done [#allocation14], 512
    $region89: #{self_attention_forward.1} parent=1 // pred_fallthru
      _
    // Predicated region
    $region90: #{self_attention_forward.1} parent=1 // pred_check
      _
    $region91: #{self_attention_forward.1} parent=1 // pred_check_branch
      %158 = sbr.rel (0) target = $region93
    $region92: #{self_attention_forward.1} parent=1 // pred_region
      %160 = dma.done [#allocation14], 16
    $region93: #{self_attention_forward.1} parent=1 // pred_fallthru
      _
    %v161 = vld [vmem:[%s0] sm:$0x3]
    %v162 = vld [vmem:[%s0 + $0x2] sm:$0x3]
    %v163 = vld [vmem:[%s0 + $0x4] sm:$0x3]
    %v164 = vld [vmem:[%s0 + $0x6] sm:$0x3]
    %v165 = vld [vmem:[%s0 + $0x8] sm:$0x3]
    %v166 = vld [vmem:[%s0 + $0xa] sm:$0x3]
    %v167 = vld [vmem:[%s0 + $0xc] sm:$0x3]
    %v168 = vld [vmem:[%s0 + $0xe] sm:$0x3]
    %v169 = vld [vmem:[#allocation4] sm:$0xff]
    %v170 = vld [vmem:[#allocation4 + $0x8] sm:$0xff]
    %v171 = vld [vmem:[#allocation4 + $0x10] sm:$0xff]
    %v172 = vld [vmem:[#allocation4 + $0x18] sm:$0xff]
    %v173 = vld [vmem:[%s3] sm:$0x3]
    %v175 = vperm.slane %v173, 0
    %v176 = vperm.slane %v173, 1
    %187 = vst [vmem:[#allocation1] ss:$4 sm:$0xff] %v161
    %s188 = scalar_lea.vmem [#allocation1], 1
    %189 = vst [vmem:[%s188] ss:$4 sm:$0xff] %v162
    %s190 = scalar_lea.vmem [#allocation1], 2
    %191 = vst [vmem:[%s190] ss:$4 sm:$0xff] %v163
    %s192 = scalar_lea.vmem [#allocation1], 3
    %193 = vst [vmem:[%s192] ss:$4 sm:$0xff] %v164
    %s194 = scalar_lea.vmem [#allocation1], 32
    %195 = vst [vmem:[%s194] ss:$4 sm:$0xff] %v165
    %s196 = scalar_lea.vmem [#allocation1], 33
    %197 = vst [vmem:[%s196] ss:$4 sm:$0xff] %v166
    %s198 = scalar_lea.vmem [#allocation1], 34
    %199 = vst [vmem:[%s198] ss:$4 sm:$0xff] %v167
    %s200 = scalar_lea.vmem [#allocation1], 35
    %201 = vst [vmem:[%s200] ss:$4 sm:$0xff] %v168
    %v202 = vld.sshfl [vmem:[#allocation1] sm:$0xff pattern:$0x73625140]
    %v203 = vld.sshfl [vmem:[#allocation1 + $0x20] sm:$0xff pattern:$0x73625140]
    %vm204 = vcmask 130048
    %v205 = vsel %vm204, %v202, 0
    %v207 = vsel %vm204, %v203, 0
    %209 = vmatpush.msra.mxu0 0.0
    %210 = vmatpush.msra.mxu0 0.0
    %211 = vmatpush.msra.mxu0 0.0
    %212 = vmatpush.msra.mxu0 0.0
    %213 = vmatpush.msra.mxu0 0.0
    %214 = vmatpush.msra.mxu0 0.0
    %215 = vmatpush.msra.mxu0 0.0
    %216 = vmatpush.msra.mxu0 0.0
    %217 = vmatpush.msra.mxu0 0.0
    %218 = vmatpush.msra.mxu0 0.0
    %219 = vmatpush.msra.mxu0 0.0
    %220 = vmatpush.msra.mxu0 0.0
    %221 = vmatpush.msra.mxu0 0.0
    %222 = vmatpush.msra.mxu0 0.0
    %223 = vmatpush.msra.mxu0 %v171
    %224 = vmatpush.msra.mxu0 %v169
    %225 = vmatmul.f32.gmra.mxu0 %v205
    %v226 = vpop.f32.mrf.mxu0
    %v227 = vadd.f32 %v175, %v226
    %228 = vmatmul.f32.gmra.mxu0 %v207
    %v229 = vpop.f32.mrf.mxu0
    %v230 = vadd.f32 %v175, %v229
    %231 = vdwg.mxu0
    %232 = vmatpush.msra.mxu0 0.0
    %233 = vmatpush.msra.mxu0 0.0
    %234 = vmatpush.msra.mxu0 0.0
    %235 = vmatpush.msra.mxu0 0.0
    %236 = vmatpush.msra.mxu0 0.0
    %237 = vmatpush.msra.mxu0 0.0
    %238 = vmatpush.msra.mxu0 0.0
    %239 = vmatpush.msra.mxu0 0.0
    %240 = vmatpush.msra.mxu0 0.0
    %241 = vmatpush.msra.mxu0 0.0
    %242 = vmatpush.msra.mxu0 0.0
    %243 = vmatpush.msra.mxu0 0.0
    %244 = vmatpush.msra.mxu0 0.0
    %245 = vmatpush.msra.mxu0 0.0
    %246 = vmatpush.msra.mxu0 %v172
    %247 = vmatpush.msra.mxu0 %v170
    %248 = vmatmul.f32.gmra.mxu0 %v205
    %v249 = vpop.f32.mrf.mxu0
    %v250 = vadd.f32 %v176, %v249
    %251 = vmatmul.f32.gmra.mxu0 %v207
    %v252 = vpop.f32.mrf.mxu0
    %v253 = vadd.f32 %v176, %v252
    %254 = vdwg.mxu0
    %v259 = vrot.slane %v250, 6
    %v260 = vrot.slane %v253, 6
    %vm261 = vcmask 1041408
    %v262 = vsel %vm261, %v227, %v259
    %vm263 = vcmask 1043458
    %v264 = vsel %vm263, %v227, %v259
    %v265 = vrot.slane %v264, 2
    %vm266 = vcmask 1045508
    %v267 = vsel %vm266, %v227, %v259
    %v268 = vrot.slane %v267, 4
    %vm269 = vcmask 1045504
    %v270 = vsel %vm269, %v259, %v227
    %v271 = vrot.slane %v270, 6
    %v272 = vsel %vm261, %v230, %v260
    %v273 = vsel %vm263, %v230, %v260
    %v274 = vrot.slane %v273, 2
    %v275 = vsel %vm266, %v230, %v260
    %v276 = vrot.slane %v275, 4
    %v277 = vsel %vm269, %v260, %v230
    %v278 = vrot.slane %v277, 6
    %v287 = vld [vmem:[%s2] sm:$0xff]
    %v288 = vld [vmem:[%s2 + $0x8] sm:$0xff]
    %v289 = vld [vmem:[%s2 + $0x10] sm:$0xff]
    %v290 = vld [vmem:[%s2 + $0x18] sm:$0xff]
    %v291 = vld [vmem:[%s2 + $0x20] sm:$0xff]
    %v292 = vld [vmem:[%s2 + $0x28] sm:$0xff]
    %v293 = vld [vmem:[%s2 + $0x30] sm:$0xff]
    %v294 = vld [vmem:[%s2 + $0x38] sm:$0xff]
    %v295 = vld [vmem:[%s2 + $0x40] sm:$0xff]
    %v296 = vld [vmem:[%s2 + $0x48] sm:$0xff]
    %v297 = vld [vmem:[%s2 + $0x50] sm:$0xff]
    %v298 = vld [vmem:[%s2 + $0x58] sm:$0xff]
    %v299 = vld [vmem:[%s2 + $0x60] sm:$0xff]
    %v300 = vld [vmem:[%s2 + $0x68] sm:$0xff]
    %v301 = vld [vmem:[%s2 + $0x70] sm:$0xff]
    %v302 = vld [vmem:[%s2 + $0x78] sm:$0xff]
    %v303 = vrot.slane %v278, 2
    %vm305 = vcmask 523264
    %v307 = vsel %vm305, 0.0, 0
    %309 = vmatpush.msra.mxu0 0.0
    %310 = vmatpush.msra.mxu0 0.0
    %311 = vmatpush.msra.mxu0 0.0
    %312 = vmatpush.msra.mxu0 0.0
    %313 = vmatpush.msra.mxu0 0.0
    %314 = vmatpush.msra.mxu0 0.0
    %315 = vmatpush.msra.mxu0 0.0
    %316 = vmatpush.msra.mxu0 0.0
    %317 = vmatpush.msra.mxu0 %v301
    %318 = vmatpush.msra.mxu0 %v299
    %319 = vmatpush.msra.mxu0 %v297
    %320 = vmatpush.msra.mxu0 %v295
    %321 = vmatpush.msra.mxu0 %v293
    %322 = vmatpush.msra.mxu0 %v291
    %323 = vmatpush.msra.mxu0 %v289
    %324 = vmatpush.msra.mxu0 %v287
    %325 = vmatmul.f32.gmra.mxu0 %v307
    %v326 = vpop.f32.mrf.mxu0
    %v327 = vadd.f32 %v262, %v326
    %328 = vdwg.mxu0
    %329 = vmatpush.msra.mxu0 0.0
    %330 = vmatpush.msra.mxu0 0.0
    %331 = vmatpush.msra.mxu0 0.0
    %332 = vmatpush.msra.mxu0 0.0
    %333 = vmatpush.msra.mxu0 0.0
    %334 = vmatpush.msra.mxu0 0.0
    %335 = vmatpush.msra.mxu0 0.0
    %336 = vmatpush.msra.mxu0 0.0
    %337 = vmatpush.msra.mxu0 %v302
    %338 = vmatpush.msra.mxu0 %v300
    %339 = vmatpush.msra.mxu0 %v298
    %340 = vmatpush.msra.mxu0 %v296
    %341 = vmatpush.msra.mxu0 %v294
    %342 = vmatpush.msra.mxu0 %v292
    %343 = vmatpush.msra.mxu0 %v290
    %344 = vmatpush.msra.mxu0 %v288
    %345 = vmatmul.f32.gmra.mxu0 %v307
    %v346 = vpop.f32.mrf.mxu0
    %v347 = vadd.f32 %v303, %v346
    %348 = vdwg.mxu0
    %v349 = vxor.u32 %v327, 2147483648
    %v350 = vxor.u32 %v347, 2147483648
    %v351 = vmul.f32 %v349, 1.442695
    %v352 = vpow.pop %v351
    %v353 = vmul.f32 %v350, 1.442695
    %v354 = vpow.pop %v353
    %v355 = vadd.f32 %v352, 1.0
    %v356 = vadd.f32 %v354, 1.0
    %v357 = vrcp.pop %v355
    %v358 = vmul.f32 %v355, %v357
    %v359 = vsub.f32 1.0, %v358
    %v360 = vmul.f32 %v357, %v359
    %v361 = vadd.f32 %v357, %v360
    %vm362 = vweird.f32 %v355
    %vm363 = vweird.f32 %v357
    %vm364 = vmor %vm362, %vm363
    %v365 = vsel %vm364, %v357, %v361
    %v366 = vand.u32 2147483647, %v355
    %vm367 = vcmp.eq.f32.partialorder %v366, 8.507059e+37
    %v368 = vand.u32 %v355, 2147483648
    %v369 = vor.u32 1.1754944e-38, %v368
    %v370 = vsel %vm367, %v369, %v365
    %v371 = vmul.f32 1.0, %v370
    %v372 = vrcp.pop %v356
    %v373 = vmul.f32 %v356, %v372
    %v374 = vsub.f32 1.0, %v373
    %v375 = vmul.f32 %v372, %v374
    %v376 = vadd.f32 %v372, %v375
    %vm377 = vweird.f32 %v356
    %vm378 = vweird.f32 %v372
    %vm379 = vmor %vm377, %vm378
    %v380 = vsel %vm379, %v372, %v376
    %v381 = vand.u32 2147483647, %v356
    %vm382 = vcmp.eq.f32.partialorder %v381, 8.507059e+37
    %v383 = vand.u32 %v356, 2147483648
    %v384 = vor.u32 1.1754944e-38, %v383
    %v385 = vsel %vm382, %v384, %v380
    %v386 = vmul.f32 1.0, %v385
    %v387 = vtanh.pop %v327
    %v388 = vtanh.pop %v347
    %v389 = vmul.f32 %v371, 0.0
    %391 = vrot.lane.b32.xlu0 %v387, 64
    %v392 = vpop.permute.xlu0 %391
    %v394 = vmul.f32 %v371, %v392
    %396 = vrot.lane.b32.xlu0 %v394, 32
    %v397 = vpop.permute.xlu0 %396
    %v399 = vadd.f32 %v389, %v397
    %v400 = vmul.f32 %v386, 0.0
    %402 = vrot.lane.b32.xlu0 %v388, 64
    %v403 = vpop.permute.xlu0 %402
    %v405 = vmul.f32 %v386, %v403
    %407 = vrot.lane.b32.xlu0 %v405, 32
    %v408 = vpop.permute.xlu0 %407
    %v410 = vadd.f32 %v400, %v408
    %412 = vrot.lane.b32.xlu0 %v399, 96
    %v413 = vpop.permute.xlu0 %412
    %vm415 = vcmask 261120
    %v416 = vsel %vm415, %v413, %v410
    %v417 = vtanh.pop %v416
    %419 = vrot.lane.b32.xlu0 %v417, 96
    %v420 = vpop.permute.xlu0 %419
    %v422 = vmul.f32 %v371, %v420
    %423 = vrot.lane.b32.xlu0 %v417, 64
    %v424 = vpop.permute.xlu0 %423
    %v426 = vmul.f32 %v386, %v424
    %428 = vrot.lane.b32.xlu0 %v422, 32
    %v429 = vpop.permute.xlu0 %428
    %vm431 = vcmask 254976
    %432 = vst.msk [vmem:[#allocation2] sm:$0x3] %vm431, %v429
    %434 = vrot.lane.b32.xlu0 %v426, 64
    %v435 = vpop.permute.xlu0 %434
    %s437 = scalar_lea.vmem [#allocation2], 14
    %vm438 = vcmask 517376
    %439 = vst.msk [vmem:[%s437] sm:$0x3] %vm438, %v435
    %v440 = vsel %vm415, %v429, %v435
    %v441 = vrot.slane %v276, 2
    %v444 = vsel %vm305, %v440, 0
    %446 = vmatpush.msra.mxu0 0.0
    %447 = vmatpush.msra.mxu0 0.0
    %448 = vmatpush.msra.mxu0 0.0
    %449 = vmatpush.msra.mxu0 0.0
    %450 = vmatpush.msra.mxu0 0.0
    %451 = vmatpush.msra.mxu0 0.0
    %452 = vmatpush.msra.mxu0 0.0
    %453 = vmatpush.msra.mxu0 0.0
    %454 = vmatpush.msra.mxu0 %v301
    %455 = vmatpush.msra.mxu0 %v299
    %456 = vmatpush.msra.mxu0 %v297
    %457 = vmatpush.msra.mxu0 %v295
    %458 = vmatpush.msra.mxu0 %v293
    %459 = vmatpush.msra.mxu0 %v291
    %460 = vmatpush.msra.mxu0 %v289
    %461 = vmatpush.msra.mxu0 %v287
    %462 = vmatmul.f32.gmra.mxu0 %v444
    %v463 = vpop.f32.mrf.mxu0
    %v464 = vadd.f32 %v265, %v463
    %465 = vdwg.mxu0
    %466 = vmatpush.msra.mxu0 0.0
    %467 = vmatpush.msra.mxu0 0.0
    %468 = vmatpush.msra.mxu0 0.0
    %469 = vmatpush.msra.mxu0 0.0
    %470 = vmatpush.msra.mxu0 0.0
    %471 = vmatpush.msra.mxu0 0.0
    %472 = vmatpush.msra.mxu0 0.0
    %473 = vmatpush.msra.mxu0 0.0
    %474 = vmatpush.msra.mxu0 %v302
    %475 = vmatpush.msra.mxu0 %v300
    %476 = vmatpush.msra.mxu0 %v298
    %477 = vmatpush.msra.mxu0 %v296
    %478 = vmatpush.msra.mxu0 %v294
    %479 = vmatpush.msra.mxu0 %v292
    %480 = vmatpush.msra.mxu0 %v290
    %481 = vmatpush.msra.mxu0 %v288
    %482 = vmatmul.f32.gmra.mxu0 %v444
    %v483 = vpop.f32.mrf.mxu0
    %v484 = vadd.f32 %v441, %v483
    %485 = vdwg.mxu0
    %v486 = vxor.u32 %v464, 2147483648
    %v487 = vxor.u32 %v484, 2147483648
    %v488 = vmul.f32 %v486, 1.442695
    %v489 = vpow.pop %v488
    %v490 = vmul.f32 %v487, 1.442695
    %v491 = vpow.pop %v490
    %v492 = vadd.f32 %v489, 1.0
    %v493 = vadd.f32 %v491, 1.0
    %v494 = vrcp.pop %v492
    %v495 = vmul.f32 %v492, %v494
    %v496 = vsub.f32 1.0, %v495
    %v497 = vmul.f32 %v494, %v496
    %v498 = vadd.f32 %v494, %v497
    %vm499 = vweird.f32 %v492
    %vm500 = vweird.f32 %v494
    %vm501 = vmor %vm499, %vm500
    %v502 = vsel %vm501, %v494, %v498
    %v503 = vand.u32 2147483647, %v492
    %vm504 = vcmp.eq.f32.partialorder %v503, 8.507059e+37
    %v505 = vand.u32 %v492, 2147483648
    %v506 = vor.u32 1.1754944e-38, %v505
    %v507 = vsel %vm504, %v506, %v502
    %v508 = vmul.f32 1.0, %v507
    %v509 = vrcp.pop %v493
    %v510 = vmul.f32 %v493, %v509
    %v511 = vsub.f32 1.0, %v510
    %v512 = vmul.f32 %v509, %v511
    %v513 = vadd.f32 %v509, %v512
    %vm514 = vweird.f32 %v493
    %vm515 = vweird.f32 %v509
    %vm516 = vmor %vm514, %vm515
    %v517 = vsel %vm516, %v509, %v513
    %v518 = vand.u32 2147483647, %v493
    %vm519 = vcmp.eq.f32.partialorder %v518, 8.507059e+37
    %v520 = vand.u32 %v493, 2147483648
    %v521 = vor.u32 1.1754944e-38, %v520
    %v522 = vsel %vm519, %v521, %v517
    %v523 = vmul.f32 1.0, %v522
    %v524 = vtanh.pop %v464
    %v525 = vtanh.pop %v484
    %v526 = vmul.f32 %v508, %v399
    %528 = vrot.lane.b32.xlu0 %v524, 64
    %v529 = vpop.permute.xlu0 %528
    %v531 = vmul.f32 %v508, %v529
    %533 = vrot.lane.b32.xlu0 %v531, 32
    %v534 = vpop.permute.xlu0 %533
    %v536 = vadd.f32 %v526, %v534
    %v537 = vmul.f32 %v523, %v410
    %539 = vrot.lane.b32.xlu0 %v525, 64
    %v540 = vpop.permute.xlu0 %539
    %v542 = vmul.f32 %v523, %v540
    %544 = vrot.lane.b32.xlu0 %v542, 32
    %v545 = vpop.permute.xlu0 %544
    %v547 = vadd.f32 %v537, %v545
    %549 = vrot.lane.b32.xlu0 %v536, 96
    %v550 = vpop.permute.xlu0 %549
    %v552 = vsel %vm415, %v550, %v547
    %v553 = vtanh.pop %v552
    %555 = vrot.lane.b32.xlu0 %v553, 96
    %v556 = vpop.permute.xlu0 %555
    %v558 = vmul.f32 %v508, %v556
    %559 = vrot.lane.b32.xlu0 %v553, 64
    %v560 = vpop.permute.xlu0 %559
    %v562 = vmul.f32 %v523, %v560
    %564 = vrot.lane.b32.xlu0 %v558, 32
    %v565 = vpop.permute.xlu0 %564
    %s567 = scalar_lea.vmem [#allocation2], 2
    %568 = vst.msk [vmem:[%s567] sm:$0x3] %vm431, %v565
    %570 = vrot.lane.b32.xlu0 %v562, 64
    %v571 = vpop.permute.xlu0 %570
    %s573 = scalar_lea.vmem [#allocation2], 12
    %574 = vst.msk [vmem:[%s573] sm:$0x3] %vm438, %v571
    %v575 = vsel %vm415, %v565, %v571
    %v576 = vrot.slane %v274, 2
    %v579 = vsel %vm305, %v575, 0
    %581 = vmatpush.msra.mxu0 0.0
    %582 = vmatpush.msra.mxu0 0.0
    %583 = vmatpush.msra.mxu0 0.0
    %584 = vmatpush.msra.mxu0 0.0
    %585 = vmatpush.msra.mxu0 0.0
    %586 = vmatpush.msra.mxu0 0.0
    %587 = vmatpush.msra.mxu0 0.0
    %588 = vmatpush.msra.mxu0 0.0
    %589 = vmatpush.msra.mxu0 %v301
    %590 = vmatpush.msra.mxu0 %v299
    %591 = vmatpush.msra.mxu0 %v297
    %592 = vmatpush.msra.mxu0 %v295
    %593 = vmatpush.msra.mxu0 %v293
    %594 = vmatpush.msra.mxu0 %v291
    %595 = vmatpush.msra.mxu0 %v289
    %596 = vmatpush.msra.mxu0 %v287
    %597 = vmatmul.f32.gmra.mxu0 %v579
    %v598 = vpop.f32.mrf.mxu0
    %v599 = vadd.f32 %v268, %v598
    %600 = vdwg.mxu0
    %601 = vmatpush.msra.mxu0 0.0
    %602 = vmatpush.msra.mxu0 0.0
    %603 = vmatpush.msra.mxu0 0.0
    %604 = vmatpush.msra.mxu0 0.0
    %605 = vmatpush.msra.mxu0 0.0
    %606 = vmatpush.msra.mxu0 0.0
    %607 = vmatpush.msra.mxu0 0.0
    %608 = vmatpush.msra.mxu0 0.0
    %609 = vmatpush.msra.mxu0 %v302
    %610 = vmatpush.msra.mxu0 %v300
    %611 = vmatpush.msra.mxu0 %v298
    %612 = vmatpush.msra.mxu0 %v296
    %613 = vmatpush.msra.mxu0 %v294
    %614 = vmatpush.msra.mxu0 %v292
    %615 = vmatpush.msra.mxu0 %v290
    %616 = vmatpush.msra.mxu0 %v288
    %617 = vmatmul.f32.gmra.mxu0 %v579
    %v618 = vpop.f32.mrf.mxu0
    %v619 = vadd.f32 %v576, %v618
    %620 = vdwg.mxu0
    %v621 = vxor.u32 %v599, 2147483648
    %v622 = vxor.u32 %v619, 2147483648
    %v623 = vmul.f32 %v621, 1.442695
    %v624 = vpow.pop %v623
    %v625 = vmul.f32 %v622, 1.442695
    %v626 = vpow.pop %v625
    %v627 = vadd.f32 %v624, 1.0
    %v628 = vadd.f32 %v626, 1.0
    %v629 = vrcp.pop %v627
    %v630 = vmul.f32 %v627, %v629
    %v631 = vsub.f32 1.0, %v630
    %v632 = vmul.f32 %v629, %v631
    %v633 = vadd.f32 %v629, %v632
    %vm634 = vweird.f32 %v627
    %vm635 = vweird.f32 %v629
    %vm636 = vmor %vm634, %vm635
    %v637 = vsel %vm636, %v629, %v633
    %v638 = vand.u32 2147483647, %v627
    %vm639 = vcmp.eq.f32.partialorder %v638, 8.507059e+37
    %v640 = vand.u32 %v627, 2147483648
    %v641 = vor.u32 1.1754944e-38, %v640
    %v642 = vsel %vm639, %v641, %v637
    %v643 = vmul.f32 1.0, %v642
    %v644 = vrcp.pop %v628
    %v645 = vmul.f32 %v628, %v644
    %v646 = vsub.f32 1.0, %v645
    %v647 = vmul.f32 %v644, %v646
    %v648 = vadd.f32 %v644, %v647
    %vm649 = vweird.f32 %v628
    %vm650 = vweird.f32 %v644
    %vm651 = vmor %vm649, %vm650
    %v652 = vsel %vm651, %v644, %v648
    %v653 = vand.u32 2147483647, %v628
    %vm654 = vcmp.eq.f32.partialorder %v653, 8.507059e+37
    %v655 = vand.u32 %v628, 2147483648
    %v656 = vor.u32 1.1754944e-38, %v655
    %v657 = vsel %vm654, %v656, %v652
    %v658 = vmul.f32 1.0, %v657
    %v659 = vtanh.pop %v599
    %v660 = vtanh.pop %v619
    %v661 = vmul.f32 %v643, %v536
    %663 = vrot.lane.b32.xlu0 %v659, 64
    %v664 = vpop.permute.xlu0 %663
    %v666 = vmul.f32 %v643, %v664
    %668 = vrot.lane.b32.xlu0 %v666, 32
    %v669 = vpop.permute.xlu0 %668
    %v671 = vadd.f32 %v661, %v669
    %v672 = vmul.f32 %v658, %v547
    %674 = vrot.lane.b32.xlu0 %v660, 64
    %v675 = vpop.permute.xlu0 %674
    %v677 = vmul.f32 %v658, %v675
    %679 = vrot.lane.b32.xlu0 %v677, 32
    %v680 = vpop.permute.xlu0 %679
    %v682 = vadd.f32 %v672, %v680
    %684 = vrot.lane.b32.xlu0 %v671, 96
    %v685 = vpop.permute.xlu0 %684
    %v687 = vsel %vm415, %v685, %v682
    %v688 = vtanh.pop %v687
    %690 = vrot.lane.b32.xlu0 %v688, 96
    %v691 = vpop.permute.xlu0 %690
    %v693 = vmul.f32 %v643, %v691
    %694 = vrot.lane.b32.xlu0 %v688, 64
    %v695 = vpop.permute.xlu0 %694
    %v697 = vmul.f32 %v658, %v695
    %699 = vrot.lane.b32.xlu0 %v693, 32
    %v700 = vpop.permute.xlu0 %699
    %s702 = scalar_lea.vmem [#allocation2], 4
    %703 = vst.msk [vmem:[%s702] sm:$0x3] %vm431, %v700
    %705 = vrot.lane.b32.xlu0 %v697, 64
    %v706 = vpop.permute.xlu0 %705
    %s708 = scalar_lea.vmem [#allocation2], 10
    %709 = vst.msk [vmem:[%s708] sm:$0x3] %vm438, %v706
    %v710 = vsel %vm415, %v700, %v706
    %v711 = vrot.slane %v272, 2
    %v714 = vsel %vm305, %v710, 0
    %716 = vmatpush.msra.mxu0 0.0
    %717 = vmatpush.msra.mxu0 0.0
    %718 = vmatpush.msra.mxu0 0.0
    %719 = vmatpush.msra.mxu0 0.0
    %720 = vmatpush.msra.mxu0 0.0
    %721 = vmatpush.msra.mxu0 0.0
    %722 = vmatpush.msra.mxu0 0.0
    %723 = vmatpush.msra.mxu0 0.0
    %724 = vmatpush.msra.mxu0 %v301
    %725 = vmatpush.msra.mxu0 %v299
    %726 = vmatpush.msra.mxu0 %v297
    %727 = vmatpush.msra.mxu0 %v295
    %728 = vmatpush.msra.mxu0 %v293
    %729 = vmatpush.msra.mxu0 %v291
    %730 = vmatpush.msra.mxu0 %v289
    %731 = vmatpush.msra.mxu0 %v287
    %732 = vmatmul.f32.gmra.mxu0 %v714
    %v733 = vpop.f32.mrf.mxu0
    %v734 = vadd.f32 %v271, %v733
    %735 = vdwg.mxu0
    %736 = vmatpush.msra.mxu0 0.0
    %737 = vmatpush.msra.mxu0 0.0
    %738 = vmatpush.msra.mxu0 0.0
    %739 = vmatpush.msra.mxu0 0.0
    %740 = vmatpush.msra.mxu0 0.0
    %741 = vmatpush.msra.mxu0 0.0
    %742 = vmatpush.msra.mxu0 0.0
    %743 = vmatpush.msra.mxu0 0.0
    %744 = vmatpush.msra.mxu0 %v302
    %745 = vmatpush.msra.mxu0 %v300
    %746 = vmatpush.msra.mxu0 %v298
    %747 = vmatpush.msra.mxu0 %v296
    %748 = vmatpush.msra.mxu0 %v294
    %749 = vmatpush.msra.mxu0 %v292
    %750 = vmatpush.msra.mxu0 %v290
    %751 = vmatpush.msra.mxu0 %v288
    %752 = vmatmul.f32.gmra.mxu0 %v714
    %v753 = vpop.f32.mrf.mxu0
    %v754 = vadd.f32 %v711, %v753
    %755 = vdwg.mxu0
    %v756 = vxor.u32 %v734, 2147483648
    %v757 = vxor.u32 %v754, 2147483648
    %v758 = vmul.f32 %v756, 1.442695
    %v759 = vpow.pop %v758
    %v760 = vmul.f32 %v757, 1.442695
    %v761 = vpow.pop %v760
    %v762 = vadd.f32 %v759, 1.0
    %v763 = vadd.f32 %v761, 1.0
    %v764 = vrcp.pop %v762
    %v765 = vmul.f32 %v762, %v764
    %v766 = vsub.f32 1.0, %v765
    %v767 = vmul.f32 %v764, %v766
    %v768 = vadd.f32 %v764, %v767
    %vm769 = vweird.f32 %v762
    %vm770 = vweird.f32 %v764
    %vm771 = vmor %vm769, %vm770
    %v772 = vsel %vm771, %v764, %v768
    %v773 = vand.u32 2147483647, %v762
    %vm774 = vcmp.eq.f32.partialorder %v773, 8.507059e+37
    %v775 = vand.u32 %v762, 2147483648
    %v776 = vor.u32 1.1754944e-38, %v775
    %v777 = vsel %vm774, %v776, %v772
    %v778 = vmul.f32 1.0, %v777
    %v779 = vrcp.pop %v763
    %v780 = vmul.f32 %v763, %v779
    %v781 = vsub.f32 1.0, %v780
    %v782 = vmul.f32 %v779, %v781
    %v783 = vadd.f32 %v779, %v782
    %vm784 = vweird.f32 %v763
    %vm785 = vweird.f32 %v779
    %vm786 = vmor %vm784, %vm785
    %v787 = vsel %vm786, %v779, %v783
    %v788 = vand.u32 2147483647, %v763
    %vm789 = vcmp.eq.f32.partialorder %v788, 8.507059e+37
    %v790 = vand.u32 %v763, 2147483648
    %v791 = vor.u32 1.1754944e-38, %v790
    %v792 = vsel %vm789, %v791, %v787
    %v793 = vmul.f32 1.0, %v792
    %v794 = vtanh.pop %v734
    %v795 = vtanh.pop %v754
    %v796 = vmul.f32 %v778, %v671
    %798 = vrot.lane.b32.xlu0 %v794, 64
    %v799 = vpop.permute.xlu0 %798
    %v801 = vmul.f32 %v778, %v799
    %803 = vrot.lane.b32.xlu0 %v801, 32
    %v804 = vpop.permute.xlu0 %803
    %v806 = vadd.f32 %v796, %v804
    %v807 = vmul.f32 %v793, %v682
    %809 = vrot.lane.b32.xlu0 %v795, 64
    %v810 = vpop.permute.xlu0 %809
    %v812 = vmul.f32 %v793, %v810
    %814 = vrot.lane.b32.xlu0 %v812, 32
    %v815 = vpop.permute.xlu0 %814
    %v817 = vadd.f32 %v807, %v815
    %819 = vrot.lane.b32.xlu0 %v806, 96
    %v820 = vpop.permute.xlu0 %819
    %v822 = vsel %vm415, %v820, %v817
    %v823 = vtanh.pop %v822
    %825 = vrot.lane.b32.xlu0 %v823, 96
    %v826 = vpop.permute.xlu0 %825
    %v828 = vmul.f32 %v778, %v826
    %829 = vrot.lane.b32.xlu0 %v823, 64
    %v830 = vpop.permute.xlu0 %829
    %v832 = vmul.f32 %v793, %v830
    %834 = vrot.lane.b32.xlu0 %v828, 32
    %v835 = vpop.permute.xlu0 %834
    %s837 = scalar_lea.vmem [#allocation2], 6
    %838 = vst.msk [vmem:[%s837] sm:$0x3] %vm431, %v835
    %840 = vrot.lane.b32.xlu0 %v832, 64
    %v841 = vpop.permute.xlu0 %840
    %s843 = scalar_lea.vmem [#allocation2], 8
    %844 = vst.msk [vmem:[%s843] sm:$0x3] %vm438, %v841
    %v845 = vsel %vm415, %v835, %v841
    %v846 = vrot.slane %v271, 2
    %v849 = vsel %vm305, %v845, 0
    %851 = vmatpush.msra.mxu0 0.0
    %852 = vmatpush.msra.mxu0 0.0
    %853 = vmatpush.msra.mxu0 0.0
    %854 = vmatpush.msra.mxu0 0.0
    %855 = vmatpush.msra.mxu0 0.0
    %856 = vmatpush.msra.mxu0 0.0
    %857 = vmatpush.msra.mxu0 0.0
    %858 = vmatpush.msra.mxu0 0.0
    %859 = vmatpush.msra.mxu0 %v301
    %860 = vmatpush.msra.mxu0 %v299
    %861 = vmatpush.msra.mxu0 %v297
    %862 = vmatpush.msra.mxu0 %v295
    %863 = vmatpush.msra.mxu0 %v293
    %864 = vmatpush.msra.mxu0 %v291
    %865 = vmatpush.msra.mxu0 %v289
    %866 = vmatpush.msra.mxu0 %v287
    %867 = vmatmul.f32.gmra.mxu0 %v849
    %v868 = vpop.f32.mrf.mxu0
    %v869 = vadd.f32 %v272, %v868
    %870 = vdwg.mxu0
    %871 = vmatpush.msra.mxu0 0.0
    %872 = vmatpush.msra.mxu0 0.0
    %873 = vmatpush.msra.mxu0 0.0
    %874 = vmatpush.msra.mxu0 0.0
    %875 = vmatpush.msra.mxu0 0.0
    %876 = vmatpush.msra.mxu0 0.0
    %877 = vmatpush.msra.mxu0 0.0
    %878 = vmatpush.msra.mxu0 0.0
    %879 = vmatpush.msra.mxu0 %v302
    %880 = vmatpush.msra.mxu0 %v300
    %881 = vmatpush.msra.mxu0 %v298
    %882 = vmatpush.msra.mxu0 %v296
    %883 = vmatpush.msra.mxu0 %v294
    %884 = vmatpush.msra.mxu0 %v292
    %885 = vmatpush.msra.mxu0 %v290
    %886 = vmatpush.msra.mxu0 %v288
    %887 = vmatmul.f32.gmra.mxu0 %v849
    %v888 = vpop.f32.mrf.mxu0
    %v889 = vadd.f32 %v846, %v888
    %890 = vdwg.mxu0
    %v891 = vxor.u32 %v869, 2147483648
    %v892 = vxor.u32 %v889, 2147483648
    %v893 = vmul.f32 %v891, 1.442695
    %v894 = vpow.pop %v893
    %v895 = vmul.f32 %v892, 1.442695
    %v896 = vpow.pop %v895
    %v897 = vadd.f32 %v894, 1.0
    %v898 = vadd.f32 %v896, 1.0
    %v899 = vrcp.pop %v897
    %v900 = vmul.f32 %v897, %v899
    %v901 = vsub.f32 1.0, %v900
    %v902 = vmul.f32 %v899, %v901
    %v903 = vadd.f32 %v899, %v902
    %vm904 = vweird.f32 %v897
    %vm905 = vweird.f32 %v899
    %vm906 = vmor %vm904, %vm905
    %v907 = vsel %vm906, %v899, %v903
    %v908 = vand.u32 2147483647, %v897
    %vm909 = vcmp.eq.f32.partialorder %v908, 8.507059e+37
    %v910 = vand.u32 %v897, 2147483648
    %v911 = vor.u32 1.1754944e-38, %v910
    %v912 = vsel %vm909, %v911, %v907
    %v913 = vmul.f32 1.0, %v912
    %v914 = vrcp.pop %v898
    %v915 = vmul.f32 %v898, %v914
    %v916 = vsub.f32 1.0, %v915
    %v917 = vmul.f32 %v914, %v916
    %v918 = vadd.f32 %v914, %v917
    %vm919 = vweird.f32 %v898
    %vm920 = vweird.f32 %v914
    %vm921 = vmor %vm919, %vm920
    %v922 = vsel %vm921, %v914, %v918
    %v923 = vand.u32 2147483647, %v898
    %vm924 = vcmp.eq.f32.partialorder %v923, 8.507059e+37
    %v925 = vand.u32 %v898, 2147483648
    %v926 = vor.u32 1.1754944e-38, %v925
    %v927 = vsel %vm924, %v926, %v922
    %v928 = vmul.f32 1.0, %v927
    %v929 = vtanh.pop %v869
    %v930 = vtanh.pop %v889
    %v931 = vmul.f32 %v913, %v806
    %933 = vrot.lane.b32.xlu0 %v929, 64
    %v934 = vpop.permute.xlu0 %933
    %v936 = vmul.f32 %v913, %v934
    %938 = vrot.lane.b32.xlu0 %v936, 32
    %v939 = vpop.permute.xlu0 %938
    %v941 = vadd.f32 %v931, %v939
    %v942 = vmul.f32 %v928, %v817
    %944 = vrot.lane.b32.xlu0 %v930, 64
    %v945 = vpop.permute.xlu0 %944
    %v947 = vmul.f32 %v928, %v945
    %949 = vrot.lane.b32.xlu0 %v947, 32
    %v950 = vpop.permute.xlu0 %949
    %v952 = vadd.f32 %v942, %v950
    %954 = vrot.lane.b32.xlu0 %v941, 96
    %v955 = vpop.permute.xlu0 %954
    %v957 = vsel %vm415, %v955, %v952
    %v958 = vtanh.pop %v957
    %960 = vrot.lane.b32.xlu0 %v958, 96
    %v961 = vpop.permute.xlu0 %960
    %v963 = vmul.f32 %v913, %v961
    %964 = vrot.lane.b32.xlu0 %v958, 64
    %v965 = vpop.permute.xlu0 %964
    %v967 = vmul.f32 %v928, %v965
    %969 = vrot.lane.b32.xlu0 %v963, 32
    %v970 = vpop.permute.xlu0 %969
    %972 = vst.msk [vmem:[%s843] sm:$0x3] %vm431, %v970
    %974 = vrot.lane.b32.xlu0 %v967, 64
    %v975 = vpop.permute.xlu0 %974
    %977 = vst.msk [vmem:[%s837] sm:$0x3] %vm438, %v975
    %v978 = vsel %vm415, %v970, %v975
    %v979 = vrot.slane %v268, 2
    %v982 = vsel %vm305, %v978, 0
    %984 = vmatpush.msra.mxu0 0.0
    %985 = vmatpush.msra.mxu0 0.0
    %986 = vmatpush.msra.mxu0 0.0
    %987 = vmatpush.msra.mxu0 0.0
    %988 = vmatpush.msra.mxu0 0.0
    %989 = vmatpush.msra.mxu0 0.0
    %990 = vmatpush.msra.mxu0 0.0
    %991 = vmatpush.msra.mxu0 0.0
    %992 = vmatpush.msra.mxu0 %v301
    %993 = vmatpush.msra.mxu0 %v299
    %994 = vmatpush.msra.mxu0 %v297
    %995 = vmatpush.msra.mxu0 %v295
    %996 = vmatpush.msra.mxu0 %v293
    %997 = vmatpush.msra.mxu0 %v291
    %998 = vmatpush.msra.mxu0 %v289
    %999 = vmatpush.msra.mxu0 %v287
    %1000 = vmatmul.f32.gmra.mxu0 %v982
    %v1001 = vpop.f32.mrf.mxu0
    %v1002 = vadd.f32 %v274, %v1001
    %1003 = vdwg.mxu0
    %1004 = vmatpush.msra.mxu0 0.0
    %1005 = vmatpush.msra.mxu0 0.0
    %1006 = vmatpush.msra.mxu0 0.0
    %1007 = vmatpush.msra.mxu0 0.0
    %1008 = vmatpush.msra.mxu0 0.0
    %1009 = vmatpush.msra.mxu0 0.0
    %1010 = vmatpush.msra.mxu0 0.0
    %1011 = vmatpush.msra.mxu0 0.0
    %1012 = vmatpush.msra.mxu0 %v302
    %1013 = vmatpush.msra.mxu0 %v300
    %1014 = vmatpush.msra.mxu0 %v298
    %1015 = vmatpush.msra.mxu0 %v296
    %1016 = vmatpush.msra.mxu0 %v294
    %1017 = vmatpush.msra.mxu0 %v292
    %1018 = vmatpush.msra.mxu0 %v290
    %1019 = vmatpush.msra.mxu0 %v288
    %1020 = vmatmul.f32.gmra.mxu0 %v982
    %v1021 = vpop.f32.mrf.mxu0
    %v1022 = vadd.f32 %v979, %v1021
    %1023 = vdwg.mxu0
    %v1024 = vxor.u32 %v1002, 2147483648
    %v1025 = vxor.u32 %v1022, 2147483648
    %v1026 = vmul.f32 %v1024, 1.442695
    %v1027 = vpow.pop %v1026
    %v1028 = vmul.f32 %v1025, 1.442695
    %v1029 = vpow.pop %v1028
    %v1030 = vadd.f32 %v1027, 1.0
    %v1031 = vadd.f32 %v1029, 1.0
    %v1032 = vrcp.pop %v1030
    %v1033 = vmul.f32 %v1030, %v1032
    %v1034 = vsub.f32 1.0, %v1033
    %v1035 = vmul.f32 %v1032, %v1034
    %v1036 = vadd.f32 %v1032, %v1035
    %vm1037 = vweird.f32 %v1030
    %vm1038 = vweird.f32 %v1032
    %vm1039 = vmor %vm1037, %vm1038
    %v1040 = vsel %vm1039, %v1032, %v1036
    %v1041 = vand.u32 2147483647, %v1030
    %vm1042 = vcmp.eq.f32.partialorder %v1041, 8.507059e+37
    %v1043 = vand.u32 %v1030, 2147483648
    %v1044 = vor.u32 1.1754944e-38, %v1043
    %v1045 = vsel %vm1042, %v1044, %v1040
    %v1046 = vmul.f32 1.0, %v1045
    %v1047 = vrcp.pop %v1031
    %v1048 = vmul.f32 %v1031, %v1047
    %v1049 = vsub.f32 1.0, %v1048
    %v1050 = vmul.f32 %v1047, %v1049
    %v1051 = vadd.f32 %v1047, %v1050
    %vm1052 = vweird.f32 %v1031
    %vm1053 = vweird.f32 %v1047
    %vm1054 = vmor %vm1052, %vm1053
    %v1055 = vsel %vm1054, %v1047, %v1051
    %v1056 = vand.u32 2147483647, %v1031
    %vm1057 = vcmp.eq.f32.partialorder %v1056, 8.507059e+37
    %v1058 = vand.u32 %v1031, 2147483648
    %v1059 = vor.u32 1.1754944e-38, %v1058
    %v1060 = vsel %vm1057, %v1059, %v1055
    %v1061 = vmul.f32 1.0, %v1060
    %v1062 = vtanh.pop %v1002
    %v1063 = vtanh.pop %v1022
    %v1064 = vmul.f32 %v1046, %v941
    %1066 = vrot.lane.b32.xlu0 %v1062, 64
    %v1067 = vpop.permute.xlu0 %1066
    %v1069 = vmul.f32 %v1046, %v1067
    %1071 = vrot.lane.b32.xlu0 %v1069, 32
    %v1072 = vpop.permute.xlu0 %1071
    %v1074 = vadd.f32 %v1064, %v1072
    %v1075 = vmul.f32 %v1061, %v952
    %1077 = vrot.lane.b32.xlu0 %v1063, 64
    %v1078 = vpop.permute.xlu0 %1077
    %v1080 = vmul.f32 %v1061, %v1078
    %1082 = vrot.lane.b32.xlu0 %v1080, 32
    %v1083 = vpop.permute.xlu0 %1082
    %v1085 = vadd.f32 %v1075, %v1083
    %1087 = vrot.lane.b32.xlu0 %v1074, 96
    %v1088 = vpop.permute.xlu0 %1087
    %v1090 = vsel %vm415, %v1088, %v1085
    %v1091 = vtanh.pop %v1090
    %1093 = vrot.lane.b32.xlu0 %v1091, 96
    %v1094 = vpop.permute.xlu0 %1093
    %v1096 = vmul.f32 %v1046, %v1094
    %1097 = vrot.lane.b32.xlu0 %v1091, 64
    %v1098 = vpop.permute.xlu0 %1097
    %v1100 = vmul.f32 %v1061, %v1098
    %1102 = vrot.lane.b32.xlu0 %v1096, 32
    %v1103 = vpop.permute.xlu0 %1102
    %1105 = vst.msk [vmem:[%s708] sm:$0x3] %vm431, %v1103
    %1107 = vrot.lane.b32.xlu0 %v1100, 64
    %v1108 = vpop.permute.xlu0 %1107
    %1110 = vst.msk [vmem:[%s702] sm:$0x3] %vm438, %v1108
    %v1111 = vsel %vm415, %v1103, %v1108
    %v1112 = vrot.slane %v265, 2
    %v1115 = vsel %vm305, %v1111, 0
    %1117 = vmatpush.msra.mxu0 0.0
    %1118 = vmatpush.msra.mxu0 0.0
    %1119 = vmatpush.msra.mxu0 0.0
    %1120 = vmatpush.msra.mxu0 0.0
    %1121 = vmatpush.msra.mxu0 0.0
    %1122 = vmatpush.msra.mxu0 0.0
    %1123 = vmatpush.msra.mxu0 0.0
    %1124 = vmatpush.msra.mxu0 0.0
    %1125 = vmatpush.msra.mxu0 %v301
    %1126 = vmatpush.msra.mxu0 %v299
    %1127 = vmatpush.msra.mxu0 %v297
    %1128 = vmatpush.msra.mxu0 %v295
    %1129 = vmatpush.msra.mxu0 %v293
    %1130 = vmatpush.msra.mxu0 %v291
    %1131 = vmatpush.msra.mxu0 %v289
    %1132 = vmatpush.msra.mxu0 %v287
    %1133 = vmatmul.f32.gmra.mxu0 %v1115
    %v1134 = vpop.f32.mrf.mxu0
    %v1135 = vadd.f32 %v276, %v1134
    %1136 = vdwg.mxu0
    %1137 = vmatpush.msra.mxu0 0.0
    %1138 = vmatpush.msra.mxu0 0.0
    %1139 = vmatpush.msra.mxu0 0.0
    %1140 = vmatpush.msra.mxu0 0.0
    %1141 = vmatpush.msra.mxu0 0.0
    %1142 = vmatpush.msra.mxu0 0.0
    %1143 = vmatpush.msra.mxu0 0.0
    %1144 = vmatpush.msra.mxu0 0.0
    %1145 = vmatpush.msra.mxu0 %v302
    %1146 = vmatpush.msra.mxu0 %v300
    %1147 = vmatpush.msra.mxu0 %v298
    %1148 = vmatpush.msra.mxu0 %v296
    %1149 = vmatpush.msra.mxu0 %v294
    %1150 = vmatpush.msra.mxu0 %v292
    %1151 = vmatpush.msra.mxu0 %v290
    %1152 = vmatpush.msra.mxu0 %v288
    %1153 = vmatmul.f32.gmra.mxu0 %v1115
    %v1154 = vpop.f32.mrf.mxu0
    %v1155 = vadd.f32 %v1112, %v1154
    %1156 = vdwg.mxu0
    %v1157 = vxor.u32 %v1135, 2147483648
    %v1158 = vxor.u32 %v1155, 2147483648
    %v1159 = vmul.f32 %v1157, 1.442695
    %v1160 = vpow.pop %v1159
    %v1161 = vmul.f32 %v1158, 1.442695
    %v1162 = vpow.pop %v1161
    %v1163 = vadd.f32 %v1160, 1.0
    %v1164 = vadd.f32 %v1162, 1.0
    %v1165 = vrcp.pop %v1163
    %v1166 = vmul.f32 %v1163, %v1165
    %v1167 = vsub.f32 1.0, %v1166
    %v1168 = vmul.f32 %v1165, %v1167
    %v1169 = vadd.f32 %v1165, %v1168
    %vm1170 = vweird.f32 %v1163
    %vm1171 = vweird.f32 %v1165
    %vm1172 = vmor %vm1170, %vm1171
    %v1173 = vsel %vm1172, %v1165, %v1169
    %v1174 = vand.u32 2147483647, %v1163
    %vm1175 = vcmp.eq.f32.partialorder %v1174, 8.507059e+37
    %v1176 = vand.u32 %v1163, 2147483648
    %v1177 = vor.u32 1.1754944e-38, %v1176
    %v1178 = vsel %vm1175, %v1177, %v1173
    %v1179 = vmul.f32 1.0, %v1178
    %v1180 = vrcp.pop %v1164
    %v1181 = vmul.f32 %v1164, %v1180
    %v1182 = vsub.f32 1.0, %v1181
    %v1183 = vmul.f32 %v1180, %v1182
    %v1184 = vadd.f32 %v1180, %v1183
    %vm1185 = vweird.f32 %v1164
    %vm1186 = vweird.f32 %v1180
    %vm1187 = vmor %vm1185, %vm1186
    %v1188 = vsel %vm1187, %v1180, %v1184
    %v1189 = vand.u32 2147483647, %v1164
    %vm1190 = vcmp.eq.f32.partialorder %v1189, 8.507059e+37
    %v1191 = vand.u32 %v1164, 2147483648
    %v1192 = vor.u32 1.1754944e-38, %v1191
    %v1193 = vsel %vm1190, %v1192, %v1188
    %v1194 = vmul.f32 1.0, %v1193
    %v1195 = vtanh.pop %v1135
    %v1196 = vtanh.pop %v1155
    %v1197 = vmul.f32 %v1179, %v1074
    %1199 = vrot.lane.b32.xlu0 %v1195, 64
    %v1200 = vpop.permute.xlu0 %1199
    %v1202 = vmul.f32 %v1179, %v1200
    %1204 = vrot.lane.b32.xlu0 %v1202, 32
    %v1205 = vpop.permute.xlu0 %1204
    %v1207 = vadd.f32 %v1197, %v1205
    %v1208 = vmul.f32 %v1194, %v1085
    %1210 = vrot.lane.b32.xlu0 %v1196, 64
    %v1211 = vpop.permute.xlu0 %1210
    %v1213 = vmul.f32 %v1194, %v1211
    %1215 = vrot.lane.b32.xlu0 %v1213, 32
    %v1216 = vpop.permute.xlu0 %1215
    %v1218 = vadd.f32 %v1208, %v1216
    %1220 = vrot.lane.b32.xlu0 %v1207, 96
    %v1221 = vpop.permute.xlu0 %1220
    %v1223 = vsel %vm415, %v1221, %v1218
    %v1224 = vtanh.pop %v1223
    %1226 = vrot.lane.b32.xlu0 %v1224, 96
    %v1227 = vpop.permute.xlu0 %1226
    %v1229 = vmul.f32 %v1179, %v1227
    %1230 = vrot.lane.b32.xlu0 %v1224, 64
    %v1231 = vpop.permute.xlu0 %1230
    %v1233 = vmul.f32 %v1194, %v1231
    %1235 = vrot.lane.b32.xlu0 %v1229, 32
    %v1236 = vpop.permute.xlu0 %1235
    %1238 = vst.msk [vmem:[%s573] sm:$0x3] %vm431, %v1236
    %1240 = vrot.lane.b32.xlu0 %v1233, 64
    %v1241 = vpop.permute.xlu0 %1240
    %1243 = vst.msk [vmem:[%s567] sm:$0x3] %vm438, %v1241
    %v1244 = vsel %vm415, %v1236, %v1241
    %v1245 = vrot.slane %v262, 2
    %v1248 = vsel %vm305, %v1244, 0
    %1250 = vmatpush.msra.mxu0 0.0
    %1251 = vmatpush.msra.mxu0 0.0
    %1252 = vmatpush.msra.mxu0 0.0
    %1253 = vmatpush.msra.mxu0 0.0
    %1254 = vmatpush.msra.mxu0 0.0
    %1255 = vmatpush.msra.mxu0 0.0
    %1256 = vmatpush.msra.mxu0 0.0
    %1257 = vmatpush.msra.mxu0 0.0
    %1258 = vmatpush.msra.mxu0 %v301
    %1259 = vmatpush.msra.mxu0 %v299
    %1260 = vmatpush.msra.mxu0 %v297
    %1261 = vmatpush.msra.mxu0 %v295
    %1262 = vmatpush.msra.mxu0 %v293
    %1263 = vmatpush.msra.mxu0 %v291
    %1264 = vmatpush.msra.mxu0 %v289
    %1265 = vmatpush.msra.mxu0 %v287
    %1266 = vmatmul.f32.gmra.mxu0 %v1248
    %v1267 = vpop.f32.mrf.mxu0
    %v1268 = vadd.f32 %v278, %v1267
    %1269 = vdwg.mxu0
    %1270 = vmatpush.msra.mxu0 0.0
    %1271 = vmatpush.msra.mxu0 0.0
    %1272 = vmatpush.msra.mxu0 0.0
    %1273 = vmatpush.msra.mxu0 0.0
    %1274 = vmatpush.msra.mxu0 0.0
    %1275 = vmatpush.msra.mxu0 0.0
    %1276 = vmatpush.msra.mxu0 0.0
    %1277 = vmatpush.msra.mxu0 0.0
    %1278 = vmatpush.msra.mxu0 %v302
    %1279 = vmatpush.msra.mxu0 %v300
    %1280 = vmatpush.msra.mxu0 %v298
    %1281 = vmatpush.msra.mxu0 %v296
    %1282 = vmatpush.msra.mxu0 %v294
    %1283 = vmatpush.msra.mxu0 %v292
    %1284 = vmatpush.msra.mxu0 %v290
    %1285 = vmatpush.msra.mxu0 %v288
    %1286 = vmatmul.f32.gmra.mxu0 %v1248
    %v1287 = vpop.f32.mrf.mxu0
    %v1288 = vadd.f32 %v1245, %v1287
    %1289 = vdwg.mxu0
    %v1290 = vxor.u32 %v1268, 2147483648
    %v1291 = vxor.u32 %v1288, 2147483648
    %v1292 = vmul.f32 %v1290, 1.442695
    %v1293 = vpow.pop %v1292
    %v1294 = vmul.f32 %v1291, 1.442695
    %v1295 = vpow.pop %v1294
    %v1296 = vadd.f32 %v1293, 1.0
    %v1297 = vadd.f32 %v1295, 1.0
    %v1298 = vrcp.pop %v1296
    %v1299 = vmul.f32 %v1296, %v1298
    %v1300 = vsub.f32 1.0, %v1299
    %v1301 = vmul.f32 %v1298, %v1300
    %v1302 = vadd.f32 %v1298, %v1301
    %vm1303 = vweird.f32 %v1296
    %vm1304 = vweird.f32 %v1298
    %vm1305 = vmor %vm1303, %vm1304
    %v1306 = vsel %vm1305, %v1298, %v1302
    %v1307 = vand.u32 2147483647, %v1296
    %vm1308 = vcmp.eq.f32.partialorder %v1307, 8.507059e+37
    %v1309 = vand.u32 %v1296, 2147483648
    %v1310 = vor.u32 1.1754944e-38, %v1309
    %v1311 = vsel %vm1308, %v1310, %v1306
    %v1312 = vmul.f32 1.0, %v1311
    %v1313 = vrcp.pop %v1297
    %v1314 = vmul.f32 %v1297, %v1313
    %v1315 = vsub.f32 1.0, %v1314
    %v1316 = vmul.f32 %v1313, %v1315
    %v1317 = vadd.f32 %v1313, %v1316
    %vm1318 = vweird.f32 %v1297
    %vm1319 = vweird.f32 %v1313
    %vm1320 = vmor %vm1318, %vm1319
    %v1321 = vsel %vm1320, %v1313, %v1317
    %v1322 = vand.u32 2147483647, %v1297
    %vm1323 = vcmp.eq.f32.partialorder %v1322, 8.507059e+37
    %v1324 = vand.u32 %v1297, 2147483648
    %v1325 = vor.u32 1.1754944e-38, %v1324
    %v1326 = vsel %vm1323, %v1325, %v1321
    %v1327 = vmul.f32 1.0, %v1326
    %v1328 = vtanh.pop %v1268
    %v1329 = vtanh.pop %v1288
    %v1330 = vmul.f32 %v1312, %v1207
    %1332 = vrot.lane.b32.xlu0 %v1328, 64
    %v1333 = vpop.permute.xlu0 %1332
    %v1335 = vmul.f32 %v1312, %v1333
    %1337 = vrot.lane.b32.xlu0 %v1335, 32
    %v1338 = vpop.permute.xlu0 %1337
    %v1340 = vadd.f32 %v1330, %v1338
    %v1341 = vmul.f32 %v1327, %v1218
    %1343 = vrot.lane.b32.xlu0 %v1329, 64
    %v1344 = vpop.permute.xlu0 %1343
    %v1346 = vmul.f32 %v1327, %v1344
    %1348 = vrot.lane.b32.xlu0 %v1346, 32
    %v1349 = vpop.permute.xlu0 %1348
    %v1351 = vadd.f32 %v1341, %v1349
    %1353 = vrot.lane.b32.xlu0 %v1340, 96
    %v1354 = vpop.permute.xlu0 %1353
    %v1356 = vsel %vm415, %v1354, %v1351
    %v1357 = vtanh.pop %v1356
    %1359 = vrot.lane.b32.xlu0 %v1357, 96
    %v1360 = vpop.permute.xlu0 %1359
    %v1362 = vmul.f32 %v1312, %v1360
    %1363 = vrot.lane.b32.xlu0 %v1357, 64
    %v1364 = vpop.permute.xlu0 %1363
    %v1366 = vmul.f32 %v1327, %v1364
    %1368 = vrot.lane.b32.xlu0 %v1362, 32
    %v1369 = vpop.permute.xlu0 %1368
    %1371 = vst.msk [vmem:[%s437] sm:$0x3] %vm431, %v1369
    %1373 = vrot.lane.b32.xlu0 %v1366, 64
    %v1374 = vpop.permute.xlu0 %1373
    %1376 = vst.msk [vmem:[#allocation2] sm:$0x3] %vm438, %v1374
    %v1377 = vsel %vm415, %v1369, %v1374
    %v1378 = vld [vmem:[#allocation2] sm:$0x3]
    %v1379 = vld [vmem:[#allocation2 + $0x2] sm:$0x3]
    %v1380 = vld [vmem:[#allocation2 + $0x4] sm:$0x3]
    %v1381 = vld [vmem:[#allocation2 + $0x6] sm:$0x3]
    %v1382 = vld [vmem:[#allocation2 + $0x8] sm:$0x3]
    %v1383 = vld [vmem:[#allocation2 + $0xa] sm:$0x3]
    %v1384 = vld [vmem:[#allocation2 + $0xc] sm:$0x3]
    %v1385 = vld [vmem:[#allocation2 + $0xe] sm:$0x3]
    %v1386 = vld [vmem:[#allocation7] sm:$0xff]
    %v1387 = vld [vmem:[#allocation7 + $0x8] sm:$0xff]
    %v1388 = vld [vmem:[#allocation7 + $0x10] sm:$0xff]
    %v1389 = vld [vmem:[#allocation7 + $0x18] sm:$0xff]
    %v1390 = vld [vmem:[#allocation7 + $0x20] sm:$0xff]
    %v1391 = vld [vmem:[#allocation7 + $0x28] sm:$0xff]
    %v1392 = vld [vmem:[#allocation7 + $0x30] sm:$0xff]
    %v1393 = vld [vmem:[#allocation7 + $0x38] sm:$0xff]
    %v1394 = vld [vmem:[%s5] sm:$0x1]
    %v1395 = vld [vmem:[%s6] sm:$0x1]
    %v1396 = vld [vmem:[#allocation3] sm:$0x1]
    %v1398 = vperm.slane %v1394, 0
    %v1408 = vrot.slane %v1379, 7
    %vm1409 = vcmask 1041409
    %v1410 = vsel %vm1409, %v1408, %v1378
    %v1411 = vrot.slane %v1380, 6
    %vm1412 = vcmask 1042434
    %v1413 = vsel %vm1412, %v1411, %v1410
    %v1414 = vrot.slane %v1381, 5
    %vm1415 = vcmask 1043459
    %v1416 = vsel %vm1415, %v1414, %v1413
    %v1417 = vrot.slane %v1382, 4
    %vm1418 = vcmask 1044484
    %v1419 = vsel %vm1418, %v1417, %v1416
    %v1420 = vrot.slane %v1383, 3
    %vm1421 = vcmask 1045509
    %v1422 = vsel %vm1421, %v1420, %v1419
    %v1423 = vrot.slane %v1384, 2
    %vm1424 = vcmask 1046534
    %v1425 = vsel %vm1424, %v1423, %v1422
    %v1426 = vrot.slane %v1385, 1
    %vm1427 = vcmask 1047559
    %v1428 = vsel %vm1427, %v1426, %v1425
    %v1429 = vsel %vm305, %v1428, 0
    %1431 = vmatpush.msra.mxu0 0.0
    %1432 = vmatpush.msra.mxu0 0.0
    %1433 = vmatpush.msra.mxu0 0.0
    %1434 = vmatpush.msra.mxu0 0.0
    %1435 = vmatpush.msra.mxu0 0.0
    %1436 = vmatpush.msra.mxu0 0.0
    %1437 = vmatpush.msra.mxu0 0.0
    %1438 = vmatpush.msra.mxu0 0.0
    %1439 = vmatpush.msra.mxu0 %v1393
    %1440 = vmatpush.msra.mxu0 %v1392
    %1441 = vmatpush.msra.mxu0 %v1391
    %1442 = vmatpush.msra.mxu0 %v1390
    %1443 = vmatpush.msra.mxu0 %v1389
    %1444 = vmatpush.msra.mxu0 %v1388
    %1445 = vmatpush.msra.mxu0 %v1387
    %1446 = vmatpush.msra.mxu0 %v1386
    %1447 = vmatmul.f32.gmra.mxu0 %v1429
    %v1448 = vpop.f32.mrf.mxu0
    %v1449 = vadd.f32 %v1398, %v1448
    %1450 = vdwg.mxu0
    %v1451 = vtanh.pop %v1449
    %v1453 = vperm.slane %v1395, 0
    %v1455 = vmul.f32 %v1451, %v1453
    %v1456 = vsel %vm305, %v1455, 0.0
    %1457 = vadd.xlane.f32.xlu0 %v1456
    %v1458 = vpop.xlane.xlu0 %1457
    %v1460 = vperm.slane %v1396, 0
    %v1462 = vadd.f32 %v1458, %v1460
    %vm1463 = vcmask 7168
    %v1464 = vsel %vm1463, %v1462, -inf
    %v1465 = vrot.slane %v1464, 4
    %v1466 = vmax.f32 %v1464, %v1465
    %v1467 = vrot.slane %v1466, 2
    %v1468 = vmax.f32 %v1466, %v1467
    %v1469 = vrot.slane %v1468, 1
    %v1470 = vmax.f32 %v1468, %v1469
    %v1471 = vsub.f32 %v1462, %v1470
    %v1472 = vmul.f32 %v1471, 1.442695
    %v1473 = vpow.pop %v1472
    %v1474 = vsel %vm1463, %v1473, 0.0
    %v1475 = vrot.slane %v1474, 4
    %v1476 = vadd.f32 %v1474, %v1475
    %v1477 = vrot.slane %v1476, 2
    %v1478 = vadd.f32 %v1476, %v1477
    %v1479 = vrot.slane %v1478, 1
    %v1480 = vadd.f32 %v1478, %v1479
    %v1481 = vrcp.pop %v1480
    %v1482 = vmul.f32 %v1473, %v1481
    %1484 = vset.pattern.permute.xlu0 0
    %1485 = vperm.xlu0 %1484, %v1482
    %v1486 = vpop.permute.xlu0 %1485
    %v1489 = vmul.f32 %v1486, %v1428
    %v1490 = vsel %vm305, %v1489, 0.0
    %v1491 = vrot.slane %v1490, 4
    %v1492 = vadd.f32 %v1490, %v1491
    %v1493 = vrot.slane %v1492, 2
    %v1494 = vadd.f32 %v1492, %v1493
    %v1495 = vrot.slane %v1494, 1
    %v1496 = vadd.f32 %v1494, %v1495
    %v1497 = vrot.slane %v1378, 1
    %v1498 = vsel %vm1409, %v1379, %v1497
    %v1499 = vrot.slane %v1380, 7
    %v1500 = vsel %vm1412, %v1499, %v1498
    %v1501 = vrot.slane %v1381, 6
    %v1502 = vsel %vm1415, %v1501, %v1500
    %v1503 = vrot.slane %v1382, 5
    %v1504 = vsel %vm1418, %v1503, %v1502
    %v1505 = vrot.slane %v1383, 4
    %v1506 = vsel %vm1421, %v1505, %v1504
    %v1507 = vrot.slane %v1384, 3
    %v1508 = vsel %vm1424, %v1507, %v1506
    %v1509 = vrot.slane %v1385, 2
    %v1510 = vsel %vm1427, %v1509, %v1508
    %v1511 = vsel %vm305, %v1510, 0
    %1513 = vmatpush.msra.mxu0 0.0
    %1514 = vmatpush.msra.mxu0 0.0
    %1515 = vmatpush.msra.mxu0 0.0
    %1516 = vmatpush.msra.mxu0 0.0
    %1517 = vmatpush.msra.mxu0 0.0
    %1518 = vmatpush.msra.mxu0 0.0
    %1519 = vmatpush.msra.mxu0 0.0
    %1520 = vmatpush.msra.mxu0 0.0
    %1521 = vmatpush.msra.mxu0 %v1393
    %1522 = vmatpush.msra.mxu0 %v1392
    %1523 = vmatpush.msra.mxu0 %v1391
    %1524 = vmatpush.msra.mxu0 %v1390
    %1525 = vmatpush.msra.mxu0 %v1389
    %1526 = vmatpush.msra.mxu0 %v1388
    %1527 = vmatpush.msra.mxu0 %v1387
    %1528 = vmatpush.msra.mxu0 %v1386
    %1529 = vmatmul.f32.gmra.mxu0 %v1511
    %v1530 = vpop.f32.mrf.mxu0
    %v1531 = vadd.f32 %v1398, %v1530
    %1532 = vdwg.mxu0
    %v1533 = vtanh.pop %v1531
    %v1534 = vmul.f32 %v1533, %v1453
    %v1535 = vsel %vm305, %v1534, 0.0
    %1536 = vadd.xlane.f32.xlu0 %v1535
    %v1537 = vpop.xlane.xlu0 %1536
    %v1538 = vadd.f32 %v1537, %v1460
    %v1539 = vsel %vm1463, %v1538, -inf
    %v1540 = vrot.slane %v1539, 4
    %v1541 = vmax.f32 %v1539, %v1540
    %v1542 = vrot.slane %v1541, 2
    %v1543 = vmax.f32 %v1541, %v1542
    %v1544 = vrot.slane %v1543, 1
    %v1545 = vmax.f32 %v1543, %v1544
    %v1546 = vsub.f32 %v1538, %v1545
    %v1547 = vmul.f32 %v1546, 1.442695
    %v1548 = vpow.pop %v1547
    %v1549 = vsel %vm1463, %v1548, 0.0
    %v1550 = vrot.slane %v1549, 4
    %v1551 = vadd.f32 %v1549, %v1550
    %v1552 = vrot.slane %v1551, 2
    %v1553 = vadd.f32 %v1551, %v1552
    %v1554 = vrot.slane %v1553, 1
    %v1555 = vadd.f32 %v1553, %v1554
    %v1556 = vrcp.pop %v1555
    %v1557 = vmul.f32 %v1548, %v1556
    %1559 = vset.pattern.permute.xlu0 0
    %1560 = vperm.xlu0 %1559, %v1557
    %v1561 = vpop.permute.xlu0 %1560
    %v1564 = vmul.f32 %v1561, %v1510
    %v1565 = vsel %vm305, %v1564, 0.0
    %v1566 = vrot.slane %v1565, 4
    %v1567 = vadd.f32 %v1565, %v1566
    %v1568 = vrot.slane %v1567, 2
    %v1569 = vadd.f32 %v1567, %v1568
    %v1570 = vrot.slane %v1569, 1
    %v1571 = vadd.f32 %v1569, %v1570
    %vm1572 = vcmask 1040384
    %v1573 = vsel %vm1572, %v1496, %v1571
    %v1574 = vld [vmem:[%s0] sm:$0x3]
    %v1575 = vld [vmem:[#allocation9] sm:$0xff]
    %v1576 = vld [vmem:[#allocation9 + $0x8] sm:$0xff]
    %v1577 = vld [vmem:[%s9] sm:$0xff]
    %v1578 = vld [vmem:[%s9 + $0x8] sm:$0xff]
    %v1579 = vld [vmem:[%s9 + $0x10] sm:$0xff]
    %v1580 = vld [vmem:[%s9 + $0x18] sm:$0xff]
    %v1581 = vld [vmem:[%s9 + $0x20] sm:$0xff]
    %v1582 = vld [vmem:[%s9 + $0x28] sm:$0xff]
    %v1583 = vld [vmem:[%s9 + $0x30] sm:$0xff]
    %v1584 = vld [vmem:[%s9 + $0x38] sm:$0xff]
    %v1586 = vsel %vm305, %v1573, 0
    %1588 = vmatpush.msra.mxu0 0.0
    %1589 = vmatpush.msra.mxu0 0.0
    %1590 = vmatpush.msra.mxu0 0.0
    %1591 = vmatpush.msra.mxu0 0.0
    %1592 = vmatpush.msra.mxu0 0.0
    %1593 = vmatpush.msra.mxu0 0.0
    %1594 = vmatpush.msra.mxu0 0.0
    %1595 = vmatpush.msra.mxu0 0.0
    %1596 = vmatpush.msra.mxu0 %v1584
    %1597 = vmatpush.msra.mxu0 %v1583
    %1598 = vmatpush.msra.mxu0 %v1582
    %1599 = vmatpush.msra.mxu0 %v1581
    %1600 = vmatpush.msra.mxu0 %v1580
    %1601 = vmatpush.msra.mxu0 %v1579
    %1602 = vmatpush.msra.mxu0 %v1578
    %1603 = vmatpush.msra.mxu0 %v1577
    %1604 = vmatmul.f32.gmra.mxu0 %v1586
    %v1605 = vpop.f32.mrf.mxu0
    %v1606 = vadd.f32 0.0, %v1605
    %1607 = vdwg.mxu0
    %v1609 = vsel %vm204, %v1574, 0
    %1611 = vmatpush.msra.mxu0 0.0
    %1612 = vmatpush.msra.mxu0 0.0
    %1613 = vmatpush.msra.mxu0 0.0
    %1614 = vmatpush.msra.mxu0 0.0
    %1615 = vmatpush.msra.mxu0 0.0
    %1616 = vmatpush.msra.mxu0 0.0
    %1617 = vmatpush.msra.mxu0 0.0
    %1618 = vmatpush.msra.mxu0 0.0
    %1619 = vmatpush.msra.mxu0 0.0
    %1620 = vmatpush.msra.mxu0 0.0
    %1621 = vmatpush.msra.mxu0 0.0
    %1622 = vmatpush.msra.mxu0 0.0
    %1623 = vmatpush.msra.mxu0 0.0
    %1624 = vmatpush.msra.mxu0 0.0
    %1625 = vmatpush.msra.mxu0 %v1576
    %1626 = vmatpush.msra.mxu0 %v1575
    %1627 = vmatmul.f32.gmra.mxu0 %v1609
    %v1628 = vpop.f32.mrf.mxu0
    %v1629 = vadd.f32 %v1606, %v1628
    %1630 = vdwg.mxu0
    %v1631 = vld [vmem:[#allocation10] sm:$0x1]
    %v1633 = vperm.slane %v1631, 0
    %v1635 = vadd.f32 %v1629, %v1633
    %v1636 = vtanh.pop %v1635
    %v1637 = vld [vmem:[#allocation12] sm:$0xff]
    %v1638 = vld [vmem:[#allocation12 + $0x8] sm:$0xff]
    %v1639 = vld [vmem:[#allocation12 + $0x10] sm:$0xff]
    %v1640 = vld [vmem:[#allocation12 + $0x18] sm:$0xff]
    %v1641 = vld [vmem:[#allocation13] sm:$0xff]
    %v1642 = vld [vmem:[#allocation13 + $0x8] sm:$0xff]
    %v1643 = vld [vmem:[#allocation13 + $0x10] sm:$0xff]
    %v1644 = vld [vmem:[#allocation13 + $0x18] sm:$0xff]
    %v1646 = vsel %vm415, %v1377, 0
    %1648 = vmatpush.msra.mxu0 0.0
    %1649 = vmatpush.msra.mxu0 0.0
    %1650 = vmatpush.msra.mxu0 0.0
    %1651 = vmatpush.msra.mxu0 0.0
    %1652 = vmatpush.msra.mxu0 0.0
    %1653 = vmatpush.msra.mxu0 0.0
    %1654 = vmatpush.msra.mxu0 0.0
    %1655 = vmatpush.msra.mxu0 0.0
    %1656 = vmatpush.msra.mxu0 0.0
    %1657 = vmatpush.msra.mxu0 0.0
    %1658 = vmatpush.msra.mxu0 0.0
    %1659 = vmatpush.msra.mxu0 0.0
    %1660 = vmatpush.msra.mxu0 %v1644
    %1661 = vmatpush.msra.mxu0 %v1643
    %1662 = vmatpush.msra.mxu0 %v1642
    %1663 = vmatpush.msra.mxu0 %v1641
    %1664 = vmatmul.f32.gmra.mxu0 %v1646
    %v1665 = vpop.f32.mrf.mxu0
    %v1666 = vadd.f32 0.0, %v1665
    %1667 = vdwg.mxu0
    %v1669 = vsel %vm415, %v1636, 0
    %1671 = vmatpush.msra.mxu0 0.0
    %1672 = vmatpush.msra.mxu0 0.0
    %1673 = vmatpush.msra.mxu0 0.0
    %1674 = vmatpush.msra.mxu0 0.0
    %1675 = vmatpush.msra.mxu0 0.0
    %1676 = vmatpush.msra.mxu0 0.0
    %1677 = vmatpush.msra.mxu0 0.0
    %1678 = vmatpush.msra.mxu0 0.0
    %1679 = vmatpush.msra.mxu0 0.0
    %1680 = vmatpush.msra.mxu0 0.0
    %1681 = vmatpush.msra.mxu0 0.0
    %1682 = vmatpush.msra.mxu0 0.0
    %1683 = vmatpush.msra.mxu0 %v1640
    %1684 = vmatpush.msra.mxu0 %v1639
    %1685 = vmatpush.msra.mxu0 %v1638
    %1686 = vmatpush.msra.mxu0 %v1637
    %1687 = vmatmul.f32.gmra.mxu0 %v1669
    %v1688 = vpop.f32.mrf.mxu0
    %v1689 = vadd.f32 %v1666, %v1688
    %1690 = vdwg.mxu0
    %v1691 = vld [vmem:[#allocation15] sm:$0x1]
    %v1693 = vperm.slane %v1691, 0
    %v1695 = vadd.f32 %v1689, %v1693
    %v1696 = vxor.u32 %v1695, 2147483648
    %v1697 = vmul.f32 %v1696, 1.442695
    %v1698 = vpow.pop %v1697
    %v1699 = vadd.f32 %v1698, 1.0
    %v1700 = vrcp.pop %v1699
    %v1701 = vmul.f32 %v1699, %v1700
    %v1702 = vsub.f32 1.0, %v1701
    %v1703 = vmul.f32 %v1700, %v1702
    %v1704 = vadd.f32 %v1700, %v1703
    %vm1705 = vweird.f32 %v1699
    %vm1706 = vweird.f32 %v1700
    %vm1707 = vmor %vm1705, %vm1706
    %v1708 = vsel %vm1707, %v1700, %v1704
    %v1709 = vand.u32 2147483647, %v1699
    %vm1710 = vcmp.eq.f32.partialorder %v1709, 8.507059e+37
    %v1711 = vand.u32 %v1699, 2147483648
    %v1712 = vor.u32 1.1754944e-38, %v1711
    %v1713 = vsel %vm1710, %v1712, %v1708
    %v1714 = vmul.f32 1.0, %v1713
    %v1715 = vtanh.pop %v1695
    %v1716 = vmul.f32 %v1714, %v1340
    %1718 = vrot.lane.b32.xlu0 %v1715, 64
    %v1719 = vpop.permute.xlu0 %1718
    %v1721 = vmul.f32 %v1714, %v1719
    %1723 = vrot.lane.b32.xlu0 %v1721, 32
    %v1724 = vpop.permute.xlu0 %1723
    %v1726 = vadd.f32 %v1716, %v1724
    %v1727 = vtanh.pop %v1726
    %1729 = vrot.lane.b32.xlu0 %v1727, 64
    %v1730 = vpop.permute.xlu0 %1729
    %v1732 = vmul.f32 %v1714, %v1730
    %v1733 = vld [vmem:[%s14] sm:$0xff]
    %v1734 = vld [vmem:[%s14 + $0x8] sm:$0xff]
    %v1735 = vld [vmem:[%s14 + $0x10] sm:$0xff]
    %v1736 = vld [vmem:[%s14 + $0x18] sm:$0xff]
    %v1737 = vld [vmem:[%s15] sm:$0x1]
    %v1739 = vperm.slane %v1737, 0
    %1742 = vrot.lane.b32.xlu0 %v1732, 32
    %v1743 = vpop.permute.xlu0 %1742
    %v1744 = vsel %vm415, %v1743, 0
    %1746 = vmatpush.msra.mxu0 0.0
    %1747 = vmatpush.msra.mxu0 0.0
    %1748 = vmatpush.msra.mxu0 0.0
    %1749 = vmatpush.msra.mxu0 0.0
    %1750 = vmatpush.msra.mxu0 0.0
    %1751 = vmatpush.msra.mxu0 0.0
    %1752 = vmatpush.msra.mxu0 0.0
    %1753 = vmatpush.msra.mxu0 0.0
    %1754 = vmatpush.msra.mxu0 0.0
    %1755 = vmatpush.msra.mxu0 0.0
    %1756 = vmatpush.msra.mxu0 0.0
    %1757 = vmatpush.msra.mxu0 0.0
    %1758 = vmatpush.msra.mxu0 %v1736
    %1759 = vmatpush.msra.mxu0 %v1735
    %1760 = vmatpush.msra.mxu0 %v1734
    %1761 = vmatpush.msra.mxu0 %v1733
    %1762 = vmatmul.f32.gmra.mxu0 %v1744
    %v1763 = vpop.f32.mrf.mxu0
    %v1764 = vadd.f32 %v1739, %v1763
    %1765 = vdwg.mxu0
    %vm1766 = vcmask 9216
    %1767 = vst.msk [vmem:[#allocation16] sm:$0x3] %vm1766, %v1764
    // Predicated region
    $region94: #{self_attention_forward.1} parent=1 // pred_check
      _
    $region95: #{self_attention_forward.1} parent=1 // pred_check_branch
      %1769 = sbr.rel (0) target = $region97
    $region96: #{self_attention_forward.1} parent=1 // pred_region
      %1771 = vsyncadd [#allocation6], 0
      %s1773 = sshll.u32 [#allocation16], 4
      %s1774 = int_to_ptr.vmem [resolvable:$true] %s1773
      %s1775 = sshll.u32 %s16, 4
      %s1776 = int_to_ptr.hbm [resolvable:$true] %s1775
      %1778 = dma.vmem_to_hbm [thread:$0]  %s1774, 32, %s1776, [#allocation6]
    $region97: #{self_attention_forward.1} parent=1 // pred_fallthru
      _
    // Predicated region
    $region98: #{self_attention_forward.1} parent=1 // pred_check
      _
    $region99: #{self_attention_forward.1} parent=1 // pred_check_branch
      %1780 = sbr.rel (0) target = $region101
    $region100: #{self_attention_forward.1} parent=1 // pred_region
      %1782 = dma.done [#allocation6], 32
    $region101: #{self_attention_forward.1} parent=1 // pred_fallthru
      _
    %1783 = vsyncpa [#allocation5], 1
    %1784 = vsyncpa [#allocation8], 1
    %1785 = vsyncpa [#allocation11], 1
    %1786 = vsyncpa [#allocation14], 1
    %1787 = vsyncpa [#allocation6], 1

</llo_original>
